<compile_context>
chip_gen: v6e
topology: v6e:2x2x1
jax: 0.10.0
libtpu: 0.0.40
codegen_flags: <defaults>
</compile_context>

<pallas_src>
import math

import jax
import jax.numpy as jnp
from jax import lax
from jax.experimental import pallas as pl
from jax.experimental.pallas import tpu as pltpu


# ---------------------------------------------------------------------------
# Kernels
# ---------------------------------------------------------------------------

def _linear_mf_kernel_packed(m_ref, v_ref, wm_ref, wvar_ref, bias_ref, out_ref):
    """Packed-output variant (D_out < 128, so [mean|var] is the lane-dense form).

    m_ref, v_ref : [TB, D_in]       input mean / variance tile
    wm_ref       : [D_in, D_out]    W^T
    wvar_ref     : [2*D_in, D_out]  [exp(Wvar)^T ; (W^2+exp(Wvar))^T]  (K-stacked)
    bias_ref     : [1, 2*D_out]     [ b | exp(bvar) ]
    out_ref      : [TB, 2*D_out]    [ out_mean | out_var ]
    """
    m = m_ref[...]
    v = v_ref[...]

    # Mean path: m @ W^T
    om = jnp.dot(m, wm_ref[...], preferred_element_type=jnp.float32)

    # Variance path, single K-stacked matmul: [m*m | v] @ [expWvar^T ; (W^2+expWvar)^T]
    x_var = jnp.concatenate([m * m, v], axis=-1)            # [TB, 2*D_in]
    ov = jnp.dot(x_var, wvar_ref[...], preferred_element_type=jnp.float32)

    out_ref[...] = jnp.concatenate([om, ov], axis=-1) + bias_ref[...]


def _linear_mf_kernel_split(m_ref, v_ref, wm_ref, wvar_ref, b_ref, bv_ref,
                            mean_ref, var_ref):
    """Two-output variant (D_out >= 128: each half is already lane dense).

    m_ref, v_ref : [TB, D_in]
    wm_ref       : [D_in, TN]
    wvar_ref     : [2*D_in, TN]
    b_ref, bv_ref: [1, TN]           bias / exp(bias_variance) tiles
    mean_ref     : [TB, TN]
    var_ref      : [TB, TN]
    """
    m = m_ref[...]
    v = v_ref[...]

    mean_ref[...] = (jnp.dot(m, wm_ref[...], preferred_element_type=jnp.float32)
                     + b_ref[...])

    x_var = jnp.concatenate([m * m, v], axis=-1)            # [TB, 2*D_in]
    var_ref[...] = (jnp.dot(x_var, wvar_ref[...], preferred_element_type=jnp.float32)
                    + bv_ref[...])


# ---------------------------------------------------------------------------
# Tiling / budget helpers
# ---------------------------------------------------------------------------

def _round_up(x, m):
    return ((x + m - 1) // m) * m


def _pick_batch_tile(batch, target):
    """Multiple-of-8 batch tile; guarantees >= 2 tiles when batch >= 16 so the
    'parallel' batch axis shards across both v7x TensorCores."""
    tb = min(target, batch)
    if batch >= 16:
        tb = min(tb, -(-batch // 2))
    return max(8, _round_up(tb, 8))


def _pick_out_tile(d_out, target):
    """D_out tile (multiple of 128, or the full extent) for the split path."""
    if d_out <= target or d_out % 128 != 0:
        return d_out
    tn = (target // 128) * 128
    while tn >= 128:
        if d_out % tn == 0:
            return tn
        tn -= 128
    return d_out


def _vmem_limit_bytes():
    """Generation-aware VMEM budget: physical capacity minus ~8 MiB headroom
    (≈120 MiB on v5e/v6e with 128 MiB VMEM, ≈56 MiB on v7x with 64 MiB)."""
    cap = 64 * 1024 * 1024
    try:
        info = pltpu.get_tpu_info()
        cap = int(getattr(info, "vmem_capacity_bytes", cap))
    except Exception:
        pass
    return max(32 * 1024 * 1024, cap - 8 * 1024 * 1024)


# ---------------------------------------------------------------------------
# Wrapper
# ---------------------------------------------------------------------------

def linear_mf_forward(inputs_mean, inputs_variance,
                      weight, weight_variance, bias, bias_variance,
                      *, block_b=512, block_n=512, use_bf16_matmul=False):
    """Fused LinearMF forward.

    inputs_mean / inputs_variance : [B, D_in]
    weight / weight_variance      : [D_out, D_in]   (PyTorch layout)
    bias / bias_variance          : [D_out]
    Returns (out_mean, out_var), each [B, D_out] float32.
    """
    B, D_in = inputs_mean.shape
    D_out = weight.shape[0]
    in_dtype = jnp.bfloat16 if use_bf16_matmul else jnp.float32

    # --- Loop-invariant weight transforms, computed once in the wrapper ------
    w32 = weight.astype(jnp.float32)
    w_exp = jnp.exp(weight_variance.astype(jnp.float32))           # exp(Wvar)
    wm_t = w32.T.astype(in_dtype)                                  # [D_in, D_out]
    # K-stacked variance weights: [exp(Wvar)^T ; (W^2+exp(Wvar))^T] -> [2*D_in, D_out]
    wvar_t = jnp.concatenate([w_exp.T, (w32 * w32 + w_exp).T],
                             axis=0).astype(in_dtype)
    b_row = bias.astype(jnp.float32)[None, :]                      # [1, D_out]
    bv_row = jnp.exp(bias_variance.astype(jnp.float32))[None, :]   # [1, D_out]

    # --- Batch tiling (pad to a tile multiple; handles ragged B) -------------
    TB = _pick_batch_tile(B, block_b)
    n_b = -(-B // TB)
    B_pad = n_b * TB
    m = inputs_mean.astype(in_dtype)
    v = inputs_variance.astype(in_dtype)
    if B_pad != B:
        pad = ((0, B_pad - B), (0, 0))
        m = jnp.pad(m, pad)
        v = jnp.pad(v, pad)

    itemsize = jnp.dtype(in_dtype).itemsize
    cost = pl.CostEstimate(
        flops=6 * B_pad * D_in * D_out,
        transcendentals=0,
        bytes_accessed=(itemsize * (2 * B_pad * D_in + 3 * D_in * D_out)
                        + 4 * (2 * D_out + 2 * B_pad * D_out)))
    vmem_limit = _vmem_limit_bytes()

    def _wspec(shape, index_map, single_buffer):
        # Grid-invariant / slow-varying weight & bias blocks: request single
        # buffering to halve their VMEM footprint (biggest payoff on v7x).
        if single_buffer:
            return pl.BlockSpec(shape, index_map,
                                pipeline_mode=pl.Buffered(buffer_count=1))
        return pl.BlockSpec(shape, index_map)

    # TODO(synk): inputs_variance=None and bias=False variants of
    # LinearMF.forward are not implemented here (full mean+variance, biased
    # path only).  exp(Wvar)/exp(bvar) overflow matches reference semantics.

    if D_out < 128:
        # ----- Packed path: [mean|var] packed into one lane-dense output -----
        bias_packed = jnp.concatenate([b_row, bv_row], axis=-1)    # [1, 2*D_out]

        def run_packed(single_buffer):
            return pl.pallas_call(
                _linear_mf_kernel_packed,
                out_shape=jax.ShapeDtypeStruct((B_pad, 2 * D_out), jnp.float32),
                grid=(n_b,),
                in_specs=[
                    pl.BlockSpec((TB, D_in), lambda i: (i, 0)),          # mean tile
                    pl.BlockSpec((TB, D_in), lambda i: (i, 0)),          # variance tile
                    _wspec((D_in, D_out), lambda i: (0, 0), single_buffer),       # W^T
                    _wspec((2 * D_in, D_out), lambda i: (0, 0), single_buffer),   # Wvar stack
                    _wspec((1, 2 * D_out), lambda i: (0, 0), single_buffer),      # packed bias
                ],
                out_specs=pl.BlockSpec((TB, 2 * D_out), lambda i: (i, 0)),
                compiler_params=pltpu.CompilerParams(
                    dimension_semantics=("parallel",),
                    vmem_limit_bytes=vmem_limit),
                cost_estimate=cost,
            )(m, v, wm_t, wvar_t, bias_packed)

        try:
            packed = run_packed(True)
        except Exception:
            packed = run_packed(False)   # fallback: default double buffering

        return packed[:B, :D_out], packed[:B, D_out:]

    # ----- Split path: D_out >= 128, two lane-dense outputs, D_out tiled -----
    TN = _pick_out_tile(D_out, block_n)
    n_n = D_out // TN

    def run_split(single_buffer):
        return pl.pallas_call(
            _linear_mf_kernel_split,
            out_shape=(jax.ShapeDtypeStruct((B_pad, D_out), jnp.float32),
                       jax.ShapeDtypeStruct((B_pad, D_out), jnp.float32)),
            grid=(n_n, n_b),   # batch innermost: weight tile resident across it
            in_specs=[
                pl.BlockSpec((TB, D_in), lambda n, b: (b, 0)),
                pl.BlockSpec((TB, D_in), lambda n, b: (b, 0)),
                _wspec((D_in, TN), lambda n, b: (0, n), single_buffer),
                _wspec((2 * D_in, TN), lambda n, b: (0, n), single_buffer),
                _wspec((1, TN), lambda n, b: (0, n), single_buffer),
                _wspec((1, TN), lambda n, b: (0, n), single_buffer),
            ],
            out_specs=(pl.BlockSpec((TB, TN), lambda n, b: (b, n)),
                       pl.BlockSpec((TB, TN), lambda n, b: (b, n))),
            compiler_params=pltpu.CompilerParams(
                dimension_semantics=("parallel", "parallel"),
                vmem_limit_bytes=vmem_limit),
            cost_estimate=cost,
        )(m, v, wm_t, wvar_t, b_row, bv_row)
    # TODO(synk): add a K (D_in) grid axis with an f32 accumulator for very
    # large D_in where even a single (2*D_in, TN) weight tile strains VMEM.

    try:
        out_mean, out_var = run_split(True)
    except Exception:
        out_mean, out_var = run_split(False)

    return out_mean[:B], out_var[:B]


# ---------------------------------------------------------------------------
# Reference + demo
# ---------------------------------------------------------------------------

def _reference(m, v, W, Wvar, b, bvar):
    hi = lax.Precision.HIGHEST
    om = jnp.dot(m, W.T, precision=hi) + b
    ov = jnp.dot(m * m, jnp.exp(Wvar).T, precision=hi)
    ov = ov + jnp.dot(v, (W * W + jnp.exp(Wvar)).T, precision=hi)
    ov = ov + jnp.exp(bvar)
    return om, ov


if __name__ == "__main__":
    # Small shapes: batch=128, in_features=64, out_features=64
    # (2*D_out = 128 -> packed lane-dense output path; 2 batch tiles).
    B, D_in, D_out = 128, 64, 64
    prior_precision = 1.0
    log_var_init = math.log(1.0 / prior_precision)

    key = jax.random.PRNGKey(0)
    k_m, k_v, k_w, k_wv, k_b, k_bv = jax.random.split(key, 6)

    inputs_mean = jax.random.normal(k_m, (B, D_in), dtype=jnp.float32)
    inputs_variance = jax.nn.softplus(
        jax.random.normal(k_v, (B, D_in))).astype(jnp.float32)

    bound = 1.0 / math.sqrt(D_in)
    weight = jax.random.uniform(
        k_w, (D_out, D_in), minval=-bound, maxval=bound, dtype=jnp.float32)
    weight_variance = (log_var_init - 1.0
                       + 0.5 * jax.random.normal(k_wv, (D_out, D_in))).astype(jnp.float32)
    bias = jax.random.uniform(
        k_b, (D_out,), minval=-bound, maxval=bound, dtype=jnp.float32)
    bias_variance = (log_var_init - 1.0
                     + 0.5 * jax.random.normal(k_bv, (D_out,))).astype(jnp.float32)

    out_mean, out_var = linear_mf_forward(
        inputs_mean, inputs_variance, weight, weight_variance, bias, bias_variance)
    out_mean = jax.block_until_ready(out_mean)
    out_var = jax.block_until_ready(out_var)

    ref_mean, ref_var = _reference(
        inputs_mean, inputs_variance, weight, weight_variance, bias, bias_variance)

    assert out_mean.shape == (B, D_out) and out_var.shape == (B, D_out)
    assert jnp.allclose(out_mean, ref_mean, atol=1e-3, rtol=1e-3), "mean mismatch"
    assert jnp.allclose(out_var, ref_var, atol=1e-3, rtol=1e-3), "variance mismatch"

    print("KERNEL_OK")
</pallas_src>

<mosaic_0001>
module attributes {stable_mosaic.version = 11 : i64} {
  func.func @_linear_mf_kernel_packed(%arg0: i32, %arg1: memref<64x64xf32, #tpu.memory_space<vmem>>, %arg2: memref<64x64xf32, #tpu.memory_space<vmem>>, %arg3: memref<64x64xf32, #tpu.memory_space<vmem>>, %arg4: memref<128x64xf32, #tpu.memory_space<vmem>>, %arg5: memref<1x128xf32, #tpu.memory_space<vmem>>, %arg6: memref<64x128xf32, #tpu.memory_space<vmem>>) attributes {dimension_semantics = [#tpu.dimension_semantics<parallel>], iteration_bounds = array<i64: 2>, scalar_prefetch = 0 : i64, scratch_operands = 0 : i64, tpu.core_type = #tpu.core_type<tc>, window_params = [{transform_indices = @transform_0, window_bounds = array<i64: 64, 64>}, {transform_indices = @transform_1, window_bounds = array<i64: 64, 64>}, {pipeline_mode = #tpu.pipeline_mode<synchronous>, transform_indices = @transform_2, window_bounds = array<i64: 64, 64>}, {pipeline_mode = #tpu.pipeline_mode<synchronous>, transform_indices = @transform_3, window_bounds = array<i64: 128, 64>}, {pipeline_mode = #tpu.pipeline_mode<synchronous>, transform_indices = @transform_4, window_bounds = array<i64: 1, 128>}, {transform_indices = @transform_5, window_bounds = array<i64: 64, 128>}]} {
    %c0 = arith.constant 0 : index
    %c0_0 = arith.constant 0 : index
    %0 = vector.load %arg1[%c0, %c0_0] : memref<64x64xf32, #tpu.memory_space<vmem>>, vector<64x64xf32>
    %c0_1 = arith.constant 0 : index
    %c0_2 = arith.constant 0 : index
    %1 = vector.load %arg2[%c0_1, %c0_2] : memref<64x64xf32, #tpu.memory_space<vmem>>, vector<64x64xf32>
    %c0_3 = arith.constant 0 : index
    %c0_4 = arith.constant 0 : index
    %2 = vector.load %arg3[%c0_3, %c0_4] : memref<64x64xf32, #tpu.memory_space<vmem>>, vector<64x64xf32>
    %cst = arith.constant dense<0.000000e+00> : vector<64x64xf32>
    %3 = tpu.matmul %0, %2, %cst {dimension_numbers = #tpu.dot_dimension_numbers<[1], [0], [0], [1], [0, 0, 1, 1], [], []>} : vector<64x64xf32>, vector<64x64xf32>, vector<64x64xf32> -> vector<64x64xf32>
    %4 = arith.mulf %0, %0 : vector<64x64xf32>
    %5 = tpu.concatenate %4, %1 in 1 : vector<64x64xf32>, vector<64x64xf32> -> vector<64x128xf32>
    %c0_5 = arith.constant 0 : index
    %c0_6 = arith.constant 0 : index
    %6 = vector.load %arg4[%c0_5, %c0_6] : memref<128x64xf32, #tpu.memory_space<vmem>>, vector<128x64xf32>
    %cst_7 = arith.constant dense<0.000000e+00> : vector<64x64xf32>
    %7 = tpu.matmul %5, %6, %cst_7 {dimension_numbers = #tpu.dot_dimension_numbers<[1], [0], [0], [1], [0, 0, 1, 1], [], []>} : vector<64x128xf32>, vector<128x64xf32>, vector<64x64xf32> -> vector<64x64xf32>
    %8 = tpu.concatenate %3, %7 in 1 : vector<64x64xf32>, vector<64x64xf32> -> vector<64x128xf32>
    %c0_8 = arith.constant 0 : index
    %c0_9 = arith.constant 0 : index
    %9 = vector.load %arg5[%c0_8, %c0_9] : memref<1x128xf32, #tpu.memory_space<vmem>>, vector<1x128xf32>
    %10 = vector.broadcast %9 : vector<1x128xf32> to vector<64x128xf32>
    %11 = arith.addf %8, %10 : vector<64x128xf32>
    %c0_10 = arith.constant 0 : index
    %c0_11 = arith.constant 0 : index
    %12 = vector.load %arg6[%c0_10, %c0_11] : memref<64x128xf32, #tpu.memory_space<vmem>>, vector<64x128xf32>
    tpu.vector_store %arg6[%c0_10, %c0_11], %11 {strides = array<i32>} : memref<64x128xf32, #tpu.memory_space<vmem>>, vector<64x128xf32>,
    return
  }
  func.func @transform_0(%arg0: i32) -> (i32, i32) {
    %c0_i32 = arith.constant 0 : i32
    %c0_i32_0 = arith.constant 0 : i32
    return %arg0, %c0_i32 : i32, i32
  }
  func.func @transform_1(%arg0: i32) -> (i32, i32) {
    %c0_i32 = arith.constant 0 : i32
    %c0_i32_0 = arith.constant 0 : i32
    return %arg0, %c0_i32 : i32, i32
  }
  func.func @transform_2(%arg0: i32) -> (i32, i32) {
    %c0_i32 = arith.constant 0 : i32
    %c0_i32_0 = arith.constant 0 : i32
    %c0_i32_1 = arith.constant 0 : i32
    return %c0_i32, %c0_i32_0 : i32, i32
  }
  func.func @transform_3(%arg0: i32) -> (i32, i32) {
    %c0_i32 = arith.constant 0 : i32
    %c0_i32_0 = arith.constant 0 : i32
    %c0_i32_1 = arith.constant 0 : i32
    return %c0_i32, %c0_i32_0 : i32, i32
  }
  func.func @transform_4(%arg0: i32) -> (i32, i32) {
    %c0_i32 = arith.constant 0 : i32
    %c0_i32_0 = arith.constant 0 : i32
    %c0_i32_1 = arith.constant 0 : i32
    return %c0_i32, %c0_i32_0 : i32, i32
  }
  func.func @transform_5(%arg0: i32) -> (i32, i32) {
    %c0_i32 = arith.constant 0 : i32
    %c0_i32_0 = arith.constant 0 : i32
    return %arg0, %c0_i32 : i32, i32
  }
}

module attributes {stable_mosaic.version = 11 : i64} {
  func.func @_linear_mf_kernel_packed(%arg0: i32, %arg1: memref<64x64xf32, #tpu.memory_space<vmem>>, %arg2: memref<64x64xf32, #tpu.memory_space<vmem>>, %arg3: memref<64x64xf32, #tpu.memory_space<vmem>>, %arg4: memref<128x64xf32, #tpu.memory_space<vmem>>, %arg5: memref<1x128xf32, #tpu.memory_space<vmem>>, %arg6: memref<64x128xf32, #tpu.memory_space<vmem>>) attributes {dimension_semantics = [#tpu.dimension_semantics<parallel>], iteration_bounds = array<i64: 2>, scalar_prefetch = 0 : i64, scratch_operands = 0 : i64, tpu.core_type = #tpu.core_type<tc>, window_params = [{transform_indices = @transform_0, window_bounds = array<i64: 64, 64>}, {transform_indices = @transform_1, window_bounds = array<i64: 64, 64>}, {pipeline_mode = #tpu.pipeline_mode<synchronous>, transform_indices = @transform_2, window_bounds = array<i64: 64, 64>}, {pipeline_mode = #tpu.pipeline_mode<synchronous>, transform_indices = @transform_3, window_bounds = array<i64: 128, 64>}, {pipeline_mode = #tpu.pipeline_mode<synchronous>, transform_indices = @transform_4, window_bounds = array<i64: 1, 128>}, {transform_indices = @transform_5, window_bounds = array<i64: 64, 128>}]} {
    %c0 = arith.constant 0 : index
    %c0_0 = arith.constant 0 : index
    %0 = vector.load %arg1[%c0, %c0_0] : memref<64x64xf32, #tpu.memory_space<vmem>>, vector<64x64xf32>
    %c0_1 = arith.constant 0 : index
    %c0_2 = arith.constant 0 : index
    %1 = vector.load %arg2[%c0_1, %c0_2] : memref<64x64xf32, #tpu.memory_space<vmem>>, vector<64x64xf32>
    %c0_3 = arith.constant 0 : index
    %c0_4 = arith.constant 0 : index
    %2 = vector.load %arg3[%c0_3, %c0_4] : memref<64x64xf32, #tpu.memory_space<vmem>>, vector<64x64xf32>
    %cst = arith.constant dense<0.000000e+00> : vector<64x64xf32>
    %3 = tpu.matmul %0, %2, %cst {dimension_numbers = #tpu.dot_dimension_numbers<[1], [0], [0], [1], [0, 0, 1, 1], [], []>} : vector<64x64xf32>, vector<64x64xf32>, vector<64x64xf32> -> vector<64x64xf32>
    %4 = arith.mulf %0, %0 : vector<64x64xf32>
    %5 = tpu.concatenate %4, %1 in 1 : vector<64x64xf32>, vector<64x64xf32> -> vector<64x128xf32>
    %c0_5 = arith.constant 0 : index
    %c0_6 = arith.constant 0 : index
    %6 = vector.load %arg4[%c0_5, %c0_6] : memref<128x64xf32, #tpu.memory_space<vmem>>, vector<128x64xf32>
    %cst_7 = arith.constant dense<0.000000e+00> : vector<64x64xf32>
    %7 = tpu.matmul %5, %6, %cst_7 {dimension_numbers = #tpu.dot_dimension_numbers<[1], [0], [0], [1], [0, 0, 1, 1], [], []>} : vector<64x128xf32>, vector<128x64xf32>, vector<64x64xf32> -> vector<64x64xf32>
    %8 = tpu.concatenate %3, %7 in 1 : vector<64x64xf32>, vector<64x64xf32> -> vector<64x128xf32>
    %c0_8 = arith.constant 0 : index
    %c0_9 = arith.constant 0 : index
    %9 = vector.load %arg5[%c0_8, %c0_9] : memref<1x128xf32, #tpu.memory_space<vmem>>, vector<1x128xf32>
    %10 = vector.broadcast %9 : vector<1x128xf32> to vector<64x128xf32>
    %11 = arith.addf %8, %10 : vector<64x128xf32>
    %c0_10 = arith.constant 0 : index
    %c0_11 = arith.constant 0 : index
    %12 = vector.load %arg6[%c0_10, %c0_11] : memref<64x128xf32, #tpu.memory_space<vmem>>, vector<64x128xf32>
    tpu.vector_store %arg6[%c0_10, %c0_11], %11 {strides = array<i32>} : memref<64x128xf32, #tpu.memory_space<vmem>>, vector<64x128xf32>,
    return
  }
  func.func @transform_0(%arg0: i32) -> (i32, i32) {
    %c0_i32 = arith.constant 0 : i32
    %c0_i32_0 = arith.constant 0 : i32
    return %arg0, %c0_i32 : i32, i32
  }
  func.func @transform_1(%arg0: i32) -> (i32, i32) {
    %c0_i32 = arith.constant 0 : i32
    %c0_i32_0 = arith.constant 0 : i32
    return %arg0, %c0_i32 : i32, i32
  }
  func.func @transform_2(%arg0: i32) -> (i32, i32) {
    %c0_i32 = arith.constant 0 : i32
    %c0_i32_0 = arith.constant 0 : i32
    %c0_i32_1 = arith.constant 0 : i32
    return %c0_i32, %c0_i32_0 : i32, i32
  }
  func.func @transform_3(%arg0: i32) -> (i32, i32) {
    %c0_i32 = arith.constant 0 : i32
    %c0_i32_0 = arith.constant 0 : i32
    %c0_i32_1 = arith.constant 0 : i32
    return %c0_i32, %c0_i32_0 : i32, i32
  }
  func.func @transform_4(%arg0: i32) -> (i32, i32) {
    %c0_i32 = arith.constant 0 : i32
    %c0_i32_0 = arith.constant 0 : i32
    %c0_i32_1 = arith.constant 0 : i32
    return %c0_i32, %c0_i32_0 : i32, i32
  }
  func.func @transform_5(%arg0: i32) -> (i32, i32) {
    %c0_i32 = arith.constant 0 : i32
    %c0_i32_0 = arith.constant 0 : i32
    return %arg0, %c0_i32 : i32, i32
  }
}

</mosaic_0001>

<llo_original>
// kernel: tpu_custom_call.1
$region0: #{tpu_custom_call.1}
  #allocation0 [shape = 'u32[]', space=smem, size = 0x4, offset = 0x4, fixed_abs, tag = 'smem constant byte address 0x4 - core index']
  #allocation1 [shape = 'u32[144,128]{1,0:T(1,128)}', space=vmem, size = 0x12000, scoped, tag = 'internal scratch']
  %s0 = inlined_call_operand.vmem [shape: f32[128,64], index: 0, kind: input, shape index: {}]
  %s1 = inlined_call_operand.vmem [shape: f32[128,64], index: 1, kind: input, shape index: {}]
  %s2 = inlined_call_operand.vmem [shape: f32[64,64], index: 2, kind: input, shape index: {}]
  %s3 = inlined_call_operand.vmem [shape: f32[128,64], index: 3, kind: input, shape index: {}]
  %s4 = inlined_call_operand.vmem [shape: f32[1,128], index: 4, kind: input, shape index: {}]
  %s5 = inlined_call_operand.hbm [shape: f32[128,128], index: 5, kind: output, shape index: {}]
  %s6 = sld [smem:[#allocation0]]
  $region53: #{tpu_custom_call.1} parent=0
    _
  %s8 = ssub.s32 1, %s6
  %s9 = scalar_select 0, %s8, %s6
  $region1: #{tpu_custom_call.1} parent=0
    #allocation2 [shape = 'u8[65536]{0}', space=vmem, size = 0x10000, scoped, tag = 'output window, operand 0']
    #allocation3 [shape = 's32[2]{0}', space=sflag, size = 0x8, scoped, tag = 'scoped memory for tpu_custom_call.1']
    %10 = vsyncpa [#allocation3], 0
    %s11 = scalar_lea.sflag [#allocation3], 1
    %12 = vsyncpa %s11, 0
    loop: start=0, step=1, limit=4
    $region2: #{tpu_custom_call.1} parent=1 // loop_pre_header
      _
    $region3: #{tpu_custom_call.1} parent=1 // loop_header
      %s14 = sphi 0, %s18
      %p15 = scmp.ge.s32.totalorder %s14, 4
      %s24 = sphi 0, %s26
      %s27 = sphi 0, %s24
      %s28 = sphi 0, %s27
      %s44 = sphi 0, %s28
      %s50 = sphi 0, %s52
      %s53 = sphi 0, %s50
      %s54 = sphi 0, %s53
      %s70 = sphi 0, %s54
      %s74 = sphi 0, %s74
      %s76 = sphi 0, %s74
      %s77 = sphi 0, %s76
      %s91 = sphi 0, %s77
      %s95 = sphi 0, %s95
      %s97 = sphi 0, %s95
      %s98 = sphi 0, %s97
      %s112 = sphi 0, %s98
      %s116 = sphi 0, %s116
      %s118 = sphi 0, %s116
      %s119 = sphi 0, %s118
      %s133 = sphi 0, %s119
      %s139 = sphi 0, %s141
      %s142 = sphi 0, %s139
      %s143 = sphi 0, %s142
      %s159 = sphi 0, %s143
    $region4: #{tpu_custom_call.1} parent=1 // loop_header_branch
      %17 = sbr.rel (%p15) target = $region8
    $region5: #{tpu_custom_call.1} parent=1 // loop_body
      %s19 = ssub.s32 %s14, 1
      %s20 = ssub.s32 %s14, 2
      %s21 = sadd.s32 %s14, 1
      %s22 = ssub.s32 %s14, %s21
      %p23 = scmp.eq.s32.totalorder %s22, 0
      %s25 = sadd.s32 %s24, 1
      %s26 = scalar_select %p23, %s24, %s25
      %p29 = pneg %p23
      %p30 = scmp.eq.s32.totalorder %s14, 1
      %p31 = por %p29, %p30
      %p32 = scmp.ne.s32.totalorder %s24, %s27
      %p33 = scmp.eq.s32.totalorder %s14, 0
      %p34 = por %p32, %p33
      %p35 = scmp.ne.s32.totalorder %s24, %s27
      %p36 = scmp.eq.s32.totalorder %s19, 1
      %p37 = por %p35, %p36
      %p38 = scmp.ne.s32.totalorder %s27, %s28
      %p39 = scmp.eq.s32.totalorder %s19, 0
      %p40 = por %p38, %p39
      %p41 = scmp.ne.s32.totalorder %s27, %s28
      %p42 = scmp.eq.s32.totalorder %s20, 1
      %p43 = por %p41, %p42
      %p45 = scmp.ne.s32.totalorder %s28, %s44
      %p46 = scmp.eq.s32.totalorder %s20, 0
      %p47 = por %p45, %p46
      %s48 = ssub.s32 %s14, %s21
      %p49 = scmp.eq.s32.totalorder %s48, 0
      %s51 = sadd.s32 %s50, 1
      %s52 = scalar_select %p49, %s50, %s51
      %p55 = pneg %p49
      %p56 = scmp.eq.s32.totalorder %s14, 1
      %p57 = por %p55, %p56
      %p58 = scmp.ne.s32.totalorder %s50, %s53
      %p59 = scmp.eq.s32.totalorder %s14, 0
      %p60 = por %p58, %p59
      %p61 = scmp.ne.s32.totalorder %s50, %s53
      %p62 = scmp.eq.s32.totalorder %s19, 1
      %p63 = por %p61, %p62
      %p64 = scmp.ne.s32.totalorder %s53, %s54
      %p65 = scmp.eq.s32.totalorder %s19, 0
      %p66 = por %p64, %p65
      %p67 = scmp.ne.s32.totalorder %s53, %s54
      %p68 = scmp.eq.s32.totalorder %s20, 1
      %p69 = por %p67, %p68
      %p71 = scmp.ne.s32.totalorder %s54, %s70
      %p72 = scmp.eq.s32.totalorder %s20, 0
      %p73 = por %p71, %p72
      %s75 = sadd.s32 %s74, 1
      %p78 = scmp.eq.s32.totalorder %s14, 1
      %p79 = scmp.ne.s32.totalorder %s74, %s76
      %p80 = scmp.eq.s32.totalorder %s14, 0
      %p81 = por %p79, %p80
      %p82 = scmp.ne.s32.totalorder %s74, %s76
      %p83 = scmp.eq.s32.totalorder %s19, 1
      %p84 = por %p82, %p83
      %p85 = scmp.ne.s32.totalorder %s76, %s77
      %p86 = scmp.eq.s32.totalorder %s19, 0
      %p87 = por %p85, %p86
      %p88 = scmp.ne.s32.totalorder %s76, %s77
      %p89 = scmp.eq.s32.totalorder %s20, 1
      %p90 = por %p88, %p89
      %p92 = scmp.ne.s32.totalorder %s77, %s91
      %p93 = scmp.eq.s32.totalorder %s20, 0
      %p94 = por %p92, %p93
      %s96 = sadd.s32 %s95, 1
      %p99 = scmp.eq.s32.totalorder %s14, 1
      %p100 = scmp.ne.s32.totalorder %s95, %s97
      %p101 = scmp.eq.s32.totalorder %s14, 0
      %p102 = por %p100, %p101
      %p103 = scmp.ne.s32.totalorder %s95, %s97
      %p104 = scmp.eq.s32.totalorder %s19, 1
      %p105 = por %p103, %p104
      %p106 = scmp.ne.s32.totalorder %s97, %s98
      %p107 = scmp.eq.s32.totalorder %s19, 0
      %p108 = por %p106, %p107
      %p109 = scmp.ne.s32.totalorder %s97, %s98
      %p110 = scmp.eq.s32.totalorder %s20, 1
      %p111 = por %p109, %p110
      %p113 = scmp.ne.s32.totalorder %s98, %s112
      %p114 = scmp.eq.s32.totalorder %s20, 0
      %p115 = por %p113, %p114
      %s117 = sadd.s32 %s116, 1
      %p120 = scmp.eq.s32.totalorder %s14, 1
      %p121 = scmp.ne.s32.totalorder %s116, %s118
      %p122 = scmp.eq.s32.totalorder %s14, 0
      %p123 = por %p121, %p122
      %p124 = scmp.ne.s32.totalorder %s116, %s118
      %p125 = scmp.eq.s32.totalorder %s19, 1
      %p126 = por %p124, %p125
      %p127 = scmp.ne.s32.totalorder %s118, %s119
      %p128 = scmp.eq.s32.totalorder %s19, 0
      %p129 = por %p127, %p128
      %p130 = scmp.ne.s32.totalorder %s118, %s119
      %p131 = scmp.eq.s32.totalorder %s20, 1
      %p132 = por %p130, %p131
      %p134 = scmp.ne.s32.totalorder %s119, %s133
      %p135 = scmp.eq.s32.totalorder %s20, 0
      %p136 = por %p134, %p135
      %s137 = ssub.s32 %s14, %s21
      %p138 = scmp.eq.s32.totalorder %s137, 0
      %s140 = sadd.s32 %s139, 1
      %s141 = scalar_select %p138, %s139, %s140
      %p144 = pneg %p138
      %p145 = scmp.eq.s32.totalorder %s14, 1
      %p146 = por %p144, %p145
      %p147 = scmp.ne.s32.totalorder %s139, %s142
      %p148 = scmp.eq.s32.totalorder %s14, 0
      %p149 = por %p147, %p148
      %p150 = scmp.ne.s32.totalorder %s139, %s142
      %p151 = scmp.eq.s32.totalorder %s19, 1
      %p152 = por %p150, %p151
      %p153 = scmp.ne.s32.totalorder %s142, %s143
      %p154 = scmp.eq.s32.totalorder %s19, 0
      %p155 = por %p153, %p154
      %p156 = scmp.ne.s32.totalorder %s142, %s143
      %p157 = scmp.eq.s32.totalorder %s20, 1
      %p158 = por %p156, %p157
      %p160 = scmp.ne.s32.totalorder %s143, %s159
      %p161 = scmp.eq.s32.totalorder %s20, 0
      %p162 = por %p160, %p161
      %p163 = scmp.le.s32.totalorder 1, %s14
      %p164 = scmp.lt.s32.totalorder %s14, 3
      %p165 = pnand %p163, %p164
      %p166 = pneg %p165
      // Predicated region
      $region9: #{tpu_custom_call.1} parent=5 // pred_check
        _
      $region10: #{tpu_custom_call.1} parent=5 // pred_check_branch
        %168 = sbr.rel (%p165) target = $region12
      $region11: #{tpu_custom_call.1} parent=5 // pred_region
        %s169 = ssub.s32 %s14, 1
        // Predicated region
        $region13: #{tpu_custom_call.1} parent=11 // pred_check
          %p170 = pneg %p87
        $region14: #{tpu_custom_call.1} parent=11 // pred_check_branch
          %172 = sbr.rel (%p170) target = $region16
        $region15: #{tpu_custom_call.1} parent=11 // pred_region
          _
        $region16: #{tpu_custom_call.1} parent=11 // pred_fallthru
          _
        // Predicated region
        $region17: #{tpu_custom_call.1} parent=11 // pred_check
          %p173 = pneg %p108
        $region18: #{tpu_custom_call.1} parent=11 // pred_check_branch
          %175 = sbr.rel (%p173) target = $region20
        $region19: #{tpu_custom_call.1} parent=11 // pred_region
          _
        $region20: #{tpu_custom_call.1} parent=11 // pred_fallthru
          _
        // Predicated region
        $region21: #{tpu_custom_call.1} parent=11 // pred_check
          %p176 = pneg %p129
        $region22: #{tpu_custom_call.1} parent=11 // pred_check_branch
          %178 = sbr.rel (%p176) target = $region24
        $region23: #{tpu_custom_call.1} parent=11 // pred_region
          _
        $region24: #{tpu_custom_call.1} parent=11 // pred_fallthru
          _
      $region12: #{tpu_custom_call.1} parent=5 // pred_fallthru
        _
      %p179 = scmp.lt.s32.totalorder %s14, 2
      // Predicated region
      $region25: #{tpu_custom_call.1} parent=5 // pred_check
        %p180 = pneg %p179
      $region26: #{tpu_custom_call.1} parent=5 // pred_check_branch
        %182 = sbr.rel (%p180) target = $region28
      $region27: #{tpu_custom_call.1} parent=5 // pred_region
        // Predicated region
        $region29: #{tpu_custom_call.1} parent=27 // pred_check
          %p183 = pneg %p34
        $region30: #{tpu_custom_call.1} parent=27 // pred_check_branch
          %185 = sbr.rel (%p183) target = $region32
        $region31: #{tpu_custom_call.1} parent=27 // pred_region
          %s186 = smul.u32 8, %s14
          %p187 = scmp.lt.s32.totalorder %s186, 15
          %s188 = scalar_select %p187, %s186, 15
          %s189 = smul.addr %s188, 8
          %s190 = scalar_lea.vmem %s0, %s189
          %s191 = smul.u32 8, %s14
        $region32: #{tpu_custom_call.1} parent=27 // pred_fallthru
          _
        // Predicated region
        $region33: #{tpu_custom_call.1} parent=27 // pred_check
          %p192 = pneg %p60
        $region34: #{tpu_custom_call.1} parent=27 // pred_check_branch
          %194 = sbr.rel (%p192) target = $region36
        $region35: #{tpu_custom_call.1} parent=27 // pred_region
          %s195 = smul.u32 8, %s14
          %p196 = scmp.lt.s32.totalorder %s195, 15
          %s197 = scalar_select %p196, %s195, 15
          %s198 = smul.addr %s197, 8
          %s199 = scalar_lea.vmem %s1, %s198
          %s200 = smul.u32 8, %s14
        $region36: #{tpu_custom_call.1} parent=27 // pred_fallthru
          _
      $region28: #{tpu_custom_call.1} parent=5 // pred_fallthru
        _
      %p201 = scmp.le.s32.totalorder 1, %s14
      %p202 = scmp.lt.s32.totalorder %s14, 3
      %p203 = pnand %p201, %p202
      %p204 = pneg %p203
      // Predicated region
      $region37: #{tpu_custom_call.1} parent=5 // pred_check
        _
      $region38: #{tpu_custom_call.1} parent=5 // pred_check_branch
        %206 = sbr.rel (%p203) target = $region40
      $region39: #{tpu_custom_call.1} parent=5 // pred_region
        %s207 = ssub.s32 %s14, 1
        %s208 = smul.u32 8, %s19
        %p209 = scmp.lt.s32.totalorder %s208, 15
        %s210 = scalar_select %p209, %s208, 15
        %s211 = smul.addr %s210, 8
        %s212 = scalar_lea.vmem %s0, %s211
        %p213 = pneg %p40
        %p214 = pneg %p37
        %s215 = smul.u32 8, %s19
        %p216 = scmp.lt.s32.totalorder %s215, 15
        %s217 = scalar_select %p216, %s215, 15
        %s218 = smul.addr %s217, 8
        %s219 = scalar_lea.vmem %s1, %s218
        %p220 = pneg %p66
        %p221 = pneg %p63
        %p222 = pneg %p87
        %p223 = pneg %p84
        %p224 = pneg %p108
        %p225 = pneg %p105
        %p226 = pneg %p129
        %p227 = pneg %p126
        %p228 = pneg %p155
        %p229 = pneg %p152
        %s230 = sand.u32 %s142, 1
        %s231 = scalar_lea.sflag [#allocation3], %s230
        %s232 = sand.u32 %s142, 1
        %s233 = smul.addr %s232, 64
        %s234 = scalar_lea.vmem [#allocation2], %s233
        %s235 = smul.u32 8, %s19
        %p236 = scmp.lt.s32.totalorder %s235, 15
        %s237 = scalar_select %p236, %s235, 15
        %s238 = smul.addr %s237, 8
        %s239 = scalar_lea.vmem %s0, %s238
        %s240 = smul.u32 8, %s19
        %s241 = smul.u32 8, %s19
        %p242 = scmp.lt.s32.totalorder %s241, 15
        %s243 = scalar_select %p242, %s241, 15
        %s244 = smul.addr %s243, 8
        %s245 = scalar_lea.vmem %s1, %s244
        %s246 = smul.u32 8, %s19
        %s247 = smul.u32 8, %s19
        %v248 = vld [vmem:[%s239] sm:$0xff]
        %v249 = vld [vmem:[%s239 + $0x8] sm:$0xff]
        %v250 = vld [vmem:[%s239 + $0x10] sm:$0xff]
        %v251 = vld [vmem:[%s239 + $0x18] sm:$0xff]
        %v252 = vld [vmem:[%s239 + $0x20] sm:$0xff]
        %v253 = vld [vmem:[%s239 + $0x28] sm:$0xff]
        %v254 = vld [vmem:[%s239 + $0x30] sm:$0xff]
        %v255 = vld [vmem:[%s239 + $0x38] sm:$0xff]
        %v256 = vld [vmem:[%s245] sm:$0xff]
        %v257 = vld [vmem:[%s245 + $0x8] sm:$0xff]
        %v258 = vld [vmem:[%s245 + $0x10] sm:$0xff]
        %v259 = vld [vmem:[%s245 + $0x18] sm:$0xff]
        %v260 = vld [vmem:[%s245 + $0x20] sm:$0xff]
        %v261 = vld [vmem:[%s245 + $0x28] sm:$0xff]
        %v262 = vld [vmem:[%s245 + $0x30] sm:$0xff]
        %v263 = vld [vmem:[%s245 + $0x38] sm:$0xff]
        %v264 = vld [vmem:[%s2] sm:$0xff]
        %v265 = vld [vmem:[%s2 + $0x8] sm:$0xff]
        %v266 = vld [vmem:[%s2 + $0x10] sm:$0xff]
        %v267 = vld [vmem:[%s2 + $0x18] sm:$0xff]
        %v268 = vld [vmem:[%s2 + $0x20] sm:$0xff]
        %v269 = vld [vmem:[%s2 + $0x28] sm:$0xff]
        %v270 = vld [vmem:[%s2 + $0x30] sm:$0xff]
        %v271 = vld [vmem:[%s2 + $0x38] sm:$0xff]
        %vm272 = vcmask 523264
        %v274 = vsel %vm272, %v248, 0
        %v277 = vsel %vm272, %v249, 0
        %v280 = vsel %vm272, %v250, 0
        %v283 = vsel %vm272, %v251, 0
        %v286 = vsel %vm272, %v252, 0
        %v289 = vsel %vm272, %v253, 0
        %v292 = vsel %vm272, %v254, 0
        %v295 = vsel %vm272, %v255, 0
        %297 = vmatprep.subr.mxu0 0.0
        %298 = vmatpush1.msra.mxu0 0.0
        %299 = vmatprep.subr.mxu0 0.0
        %300 = vmatpush1.msra.mxu0 0.0
        %301 = vmatprep.subr.mxu0 0.0
        %302 = vmatpush1.msra.mxu0 0.0
        %303 = vmatprep.subr.mxu0 0.0
        %304 = vmatpush1.msra.mxu0 0.0
        %305 = vmatprep.subr.mxu0 0.0
        %306 = vmatpush1.msra.mxu0 0.0
        %307 = vmatprep.subr.mxu0 0.0
        %308 = vmatpush1.msra.mxu0 0.0
        %309 = vmatprep.subr.mxu0 0.0
        %310 = vmatpush1.msra.mxu0 0.0
        %311 = vmatprep.subr.mxu0 0.0
        %312 = vmatpush1.msra.mxu0 0.0
        %313 = vmatprep.subr.mxu0 0.0
        %314 = vmatpush1.msra.mxu0 %v271
        %315 = vmatprep.subr.mxu0 0.0
        %316 = vmatpush1.msra.mxu0 %v270
        %317 = vmatprep.subr.mxu0 0.0
        %318 = vmatpush1.msra.mxu0 %v269
        %319 = vmatprep.subr.mxu0 0.0
        %320 = vmatpush1.msra.mxu0 %v268
        %321 = vmatprep.subr.mxu0 0.0
        %322 = vmatpush1.msra.mxu0 %v267
        %323 = vmatprep.subr.mxu0 0.0
        %324 = vmatpush1.msra.mxu0 %v266
        %325 = vmatprep.subr.mxu0 0.0
        %326 = vmatpush1.msra.mxu0 %v265
        %327 = vmatprep.subr.mxu0 0.0
        %328 = vmatpush1.msra.mxu0 %v264
        %329 = vmatprep.subr.mxu0 0.0
        %330 = vmatpush2.msra.mxu0 0.0
        %331 = vmatprep.subr.mxu0 0.0
        %332 = vmatpush2.msra.mxu0 0.0
        %333 = vmatprep.subr.mxu0 0.0
        %334 = vmatpush2.msra.mxu0 0.0
        %335 = vmatprep.subr.mxu0 0.0
        %336 = vmatpush2.msra.mxu0 0.0
        %337 = vmatprep.subr.mxu0 0.0
        %338 = vmatpush2.msra.mxu0 0.0
        %339 = vmatprep.subr.mxu0 0.0
        %340 = vmatpush2.msra.mxu0 0.0
        %341 = vmatprep.subr.mxu0 0.0
        %342 = vmatpush2.msra.mxu0 0.0
        %343 = vmatprep.subr.mxu0 0.0
        %344 = vmatpush2.msra.mxu0 0.0
        %345 = vmatprep.subr.mxu0 0.0
        %346 = vmatpush2.msra.mxu0 0.0
        %347 = vmatprep.subr.mxu0 0.0
        %348 = vmatpush2.msra.mxu0 0.0
        %349 = vmatprep.subr.mxu0 0.0
        %350 = vmatpush2.msra.mxu0 0.0
        %351 = vmatprep.subr.mxu0 0.0
        %352 = vmatpush2.msra.mxu0 0.0
        %353 = vmatprep.subr.mxu0 0.0
        %354 = vmatpush2.msra.mxu0 0.0
        %355 = vmatprep.subr.mxu0 0.0
        %356 = vmatpush2.msra.mxu0 0.0
        %357 = vmatprep.subr.mxu0 0.0
        %358 = vmatpush2.msra.mxu0 0.0
        %359 = vmatprep.subr.mxu0 0.0
        %360 = vmatpush2.msra.mxu0 0.0
        %361 = vmatprep.mubr.f32.mxu0 0.0
        %362 = vmatmul.mubr.f32.gmra.mxu0 %v274
        %v363 = vpop.f32.mrf.mxu0
        %v364 = vadd.f32 0.0, %v363
        %v365 = vpop.f32.mrf.mxu0
        %366 = vmatprep.mubr.f32.mxu0 0.0
        %367 = vmatmul.mubr.f32.gmra.mxu0 %v277
        %v368 = vpop.f32.mrf.mxu0
        %v369 = vadd.f32 0.0, %v368
        %v370 = vpop.f32.mrf.mxu0
        %371 = vmatprep.mubr.f32.mxu0 0.0
        %372 = vmatmul.mubr.f32.gmra.mxu0 %v280
        %v373 = vpop.f32.mrf.mxu0
        %v374 = vadd.f32 0.0, %v373
        %v375 = vpop.f32.mrf.mxu0
        %376 = vmatprep.mubr.f32.mxu0 0.0
        %377 = vmatmul.mubr.f32.gmra.mxu0 %v283
        %v378 = vpop.f32.mrf.mxu0
        %v379 = vadd.f32 0.0, %v378
        %v380 = vpop.f32.mrf.mxu0
        %381 = vmatprep.mubr.f32.mxu0 0.0
        %382 = vmatmul.mubr.f32.gmra.mxu0 %v286
        %v383 = vpop.f32.mrf.mxu0
        %v384 = vadd.f32 0.0, %v383
        %v385 = vpop.f32.mrf.mxu0
        %386 = vmatprep.mubr.f32.mxu0 0.0
        %387 = vmatmul.mubr.f32.gmra.mxu0 %v289
        %v388 = vpop.f32.mrf.mxu0
        %v389 = vadd.f32 0.0, %v388
        %v390 = vpop.f32.mrf.mxu0
        %391 = vmatprep.mubr.f32.mxu0 0.0
        %392 = vmatmul.mubr.f32.gmra.mxu0 %v292
        %v393 = vpop.f32.mrf.mxu0
        %v394 = vadd.f32 0.0, %v393
        %v395 = vpop.f32.mrf.mxu0
        %396 = vmatprep.mubr.f32.mxu0 0.0
        %397 = vmatmul.mubr.f32.gmra.mxu0 %v295
        %v398 = vpop.f32.mrf.mxu0
        %v399 = vadd.f32 0.0, %v398
        %v400 = vpop.f32.mrf.mxu0
        %401 = vdwg.mxu0
        %v402 = vmul.f32 %v248, %v248
        %v403 = vmul.f32 %v249, %v249
        %v404 = vmul.f32 %v250, %v250
        %v405 = vmul.f32 %v251, %v251
        %v406 = vmul.f32 %v252, %v252
        %v407 = vmul.f32 %v253, %v253
        %v408 = vmul.f32 %v254, %v254
        %v409 = vmul.f32 %v255, %v255
        %418 = vrot.lane.b32.xlu0 %v256, 64
        %v419 = vpop.permute.xlu0 %418
        %420 = vrot.lane.b32.xlu0 %v257, 64
        %v421 = vpop.permute.xlu0 %420
        %422 = vrot.lane.b32.xlu0 %v258, 64
        %v423 = vpop.permute.xlu0 %422
        %424 = vrot.lane.b32.xlu0 %v259, 64
        %v425 = vpop.permute.xlu0 %424
        %426 = vrot.lane.b32.xlu0 %v260, 64
        %v427 = vpop.permute.xlu0 %426
        %428 = vrot.lane.b32.xlu0 %v261, 64
        %v429 = vpop.permute.xlu0 %428
        %430 = vrot.lane.b32.xlu0 %v262, 64
        %v431 = vpop.permute.xlu0 %430
        %432 = vrot.lane.b32.xlu0 %v263, 64
        %v433 = vpop.permute.xlu0 %432
        %v442 = vsel %vm272, %v402, %v419
        %v443 = vsel %vm272, %v403, %v421
        %v444 = vsel %vm272, %v404, %v423
        %v445 = vsel %vm272, %v405, %v425
        %v446 = vsel %vm272, %v406, %v427
        %v447 = vsel %vm272, %v407, %v429
        %v448 = vsel %vm272, %v408, %v431
        %v449 = vsel %vm272, %v409, %v433
        %v450 = vld [vmem:[%s3] sm:$0xff]
        %v451 = vld [vmem:[%s3 + $0x8] sm:$0xff]
        %v452 = vld [vmem:[%s3 + $0x10] sm:$0xff]
        %v453 = vld [vmem:[%s3 + $0x18] sm:$0xff]
        %v454 = vld [vmem:[%s3 + $0x20] sm:$0xff]
        %v455 = vld [vmem:[%s3 + $0x28] sm:$0xff]
        %v456 = vld [vmem:[%s3 + $0x30] sm:$0xff]
        %v457 = vld [vmem:[%s3 + $0x38] sm:$0xff]
        %v458 = vld [vmem:[%s3 + $0x40] sm:$0xff]
        %v459 = vld [vmem:[%s3 + $0x48] sm:$0xff]
        %v460 = vld [vmem:[%s3 + $0x50] sm:$0xff]
        %v461 = vld [vmem:[%s3 + $0x58] sm:$0xff]
        %v462 = vld [vmem:[%s3 + $0x60] sm:$0xff]
        %v463 = vld [vmem:[%s3 + $0x68] sm:$0xff]
        %v464 = vld [vmem:[%s3 + $0x70] sm:$0xff]
        %v465 = vld [vmem:[%s3 + $0x78] sm:$0xff]
        %466 = vmatprep.subr.mxu0 0.0
        %467 = vmatpush1.msra.mxu0 %v465
        %468 = vmatprep.subr.mxu0 0.0
        %469 = vmatpush1.msra.mxu0 %v464
        %470 = vmatprep.subr.mxu0 0.0
        %471 = vmatpush1.msra.mxu0 %v463
        %472 = vmatprep.subr.mxu0 0.0
        %473 = vmatpush1.msra.mxu0 %v462
        %474 = vmatprep.subr.mxu0 0.0
        %475 = vmatpush1.msra.mxu0 %v461
        %476 = vmatprep.subr.mxu0 0.0
        %477 = vmatpush1.msra.mxu0 %v460
        %478 = vmatprep.subr.mxu0 0.0
        %479 = vmatpush1.msra.mxu0 %v459
        %480 = vmatprep.subr.mxu0 0.0
        %481 = vmatpush1.msra.mxu0 %v458
        %482 = vmatprep.subr.mxu0 0.0
        %483 = vmatpush1.msra.mxu0 %v457
        %484 = vmatprep.subr.mxu0 0.0
        %485 = vmatpush1.msra.mxu0 %v456
        %486 = vmatprep.subr.mxu0 0.0
        %487 = vmatpush1.msra.mxu0 %v455
        %488 = vmatprep.subr.mxu0 0.0
        %489 = vmatpush1.msra.mxu0 %v454
        %490 = vmatprep.subr.mxu0 0.0
        %491 = vmatpush1.msra.mxu0 %v453
        %492 = vmatprep.subr.mxu0 0.0
        %493 = vmatpush1.msra.mxu0 %v452
        %494 = vmatprep.subr.mxu0 0.0
        %495 = vmatpush1.msra.mxu0 %v451
        %496 = vmatprep.subr.mxu0 0.0
        %497 = vmatpush1.msra.mxu0 %v450
        %498 = vmatprep.subr.mxu0 0.0
        %499 = vmatpush2.msra.mxu0 0.0
        %500 = vmatprep.subr.mxu0 0.0
        %501 = vmatpush2.msra.mxu0 0.0
        %502 = vmatprep.subr.mxu0 0.0
        %503 = vmatpush2.msra.mxu0 0.0
        %504 = vmatprep.subr.mxu0 0.0
        %505 = vmatpush2.msra.mxu0 0.0
        %506 = vmatprep.subr.mxu0 0.0
        %507 = vmatpush2.msra.mxu0 0.0
        %508 = vmatprep.subr.mxu0 0.0
        %509 = vmatpush2.msra.mxu0 0.0
        %510 = vmatprep.subr.mxu0 0.0
        %511 = vmatpush2.msra.mxu0 0.0
        %512 = vmatprep.subr.mxu0 0.0
        %513 = vmatpush2.msra.mxu0 0.0
        %514 = vmatprep.subr.mxu0 0.0
        %515 = vmatpush2.msra.mxu0 0.0
        %516 = vmatprep.subr.mxu0 0.0
        %517 = vmatpush2.msra.mxu0 0.0
        %518 = vmatprep.subr.mxu0 0.0
        %519 = vmatpush2.msra.mxu0 0.0
        %520 = vmatprep.subr.mxu0 0.0
        %521 = vmatpush2.msra.mxu0 0.0
        %522 = vmatprep.subr.mxu0 0.0
        %523 = vmatpush2.msra.mxu0 0.0
        %524 = vmatprep.subr.mxu0 0.0
        %525 = vmatpush2.msra.mxu0 0.0
        %526 = vmatprep.subr.mxu0 0.0
        %527 = vmatpush2.msra.mxu0 0.0
        %528 = vmatprep.subr.mxu0 0.0
        %529 = vmatpush2.msra.mxu0 0.0
        %530 = vmatprep.mubr.f32.mxu0 0.0
        %531 = vmatmul.mubr.f32.gmra.mxu0 %v442
        %v532 = vpop.f32.mrf.mxu0
        %v533 = vadd.f32 0.0, %v532
        %v534 = vpop.f32.mrf.mxu0
        %535 = vmatprep.mubr.f32.mxu0 0.0
        %536 = vmatmul.mubr.f32.gmra.mxu0 %v443
        %v537 = vpop.f32.mrf.mxu0
        %v538 = vadd.f32 0.0, %v537
        %v539 = vpop.f32.mrf.mxu0
        %540 = vmatprep.mubr.f32.mxu0 0.0
        %541 = vmatmul.mubr.f32.gmra.mxu0 %v444
        %v542 = vpop.f32.mrf.mxu0
        %v543 = vadd.f32 0.0, %v542
        %v544 = vpop.f32.mrf.mxu0
        %545 = vmatprep.mubr.f32.mxu0 0.0
        %546 = vmatmul.mubr.f32.gmra.mxu0 %v445
        %v547 = vpop.f32.mrf.mxu0
        %v548 = vadd.f32 0.0, %v547
        %v549 = vpop.f32.mrf.mxu0
        %550 = vmatprep.mubr.f32.mxu0 0.0
        %551 = vmatmul.mubr.f32.gmra.mxu0 %v446
        %v552 = vpop.f32.mrf.mxu0
        %v553 = vadd.f32 0.0, %v552
        %v554 = vpop.f32.mrf.mxu0
        %555 = vmatprep.mubr.f32.mxu0 0.0
        %556 = vmatmul.mubr.f32.gmra.mxu0 %v447
        %v557 = vpop.f32.mrf.mxu0
        %v558 = vadd.f32 0.0, %v557
        %v559 = vpop.f32.mrf.mxu0
        %560 = vmatprep.mubr.f32.mxu0 0.0
        %561 = vmatmul.mubr.f32.gmra.mxu0 %v448
        %v562 = vpop.f32.mrf.mxu0
        %v563 = vadd.f32 0.0, %v562
        %v564 = vpop.f32.mrf.mxu0
        %565 = vmatprep.mubr.f32.mxu0 0.0
        %566 = vmatmul.mubr.f32.gmra.mxu0 %v449
        %v567 = vpop.f32.mrf.mxu0
        %v568 = vadd.f32 0.0, %v567
        %v569 = vpop.f32.mrf.mxu0
        %570 = vdwg.mxu0
        %579 = vrot.lane.b32.xlu0 %v533, 64
        %v580 = vpop.permute.xlu0 %579
        %581 = vrot.lane.b32.xlu0 %v538, 64
        %v582 = vpop.permute.xlu0 %581
        %583 = vrot.lane.b32.xlu0 %v543, 64
        %v584 = vpop.permute.xlu0 %583
        %585 = vrot.lane.b32.xlu0 %v548, 64
        %v586 = vpop.permute.xlu0 %585
        %587 = vrot.lane.b32.xlu0 %v553, 64
        %v588 = vpop.permute.xlu0 %587
        %589 = vrot.lane.b32.xlu0 %v558, 64
        %v590 = vpop.permute.xlu0 %589
        %591 = vrot.lane.b32.xlu0 %v563, 64
        %v592 = vpop.permute.xlu0 %591
        %593 = vrot.lane.b32.xlu0 %v568, 64
        %v594 = vpop.permute.xlu0 %593
        %v603 = vsel %vm272, %v364, %v580
        %v604 = vsel %vm272, %v369, %v582
        %v605 = vsel %vm272, %v374, %v584
        %v606 = vsel %vm272, %v379, %v586
        %v607 = vsel %vm272, %v384, %v588
        %v608 = vsel %vm272, %v389, %v590
        %v609 = vsel %vm272, %v394, %v592
        %v610 = vsel %vm272, %v399, %v594
        %v611 = vld [vmem:[%s4] sm:$0x1]
        %v613 = vlaneseq
        %v614 = vshrl.u32 %v613, 7
        %v615 = vsub.s32 0, %v614
        %v616 = vrot.slane %v611, %v615
        %v618 = vadd.f32 %v603, %v616
        %v619 = vadd.f32 %v604, %v616
        %v620 = vadd.f32 %v605, %v616
        %v621 = vadd.f32 %v606, %v616
        %v622 = vadd.f32 %v607, %v616
        %v623 = vadd.f32 %v608, %v616
        %v624 = vadd.f32 %v609, %v616
        %v625 = vadd.f32 %v610, %v616
        %626 = vst [vmem:[%s234] sm:$0xff] %v618
        %627 = vst [vmem:[%s234 + $0x8] sm:$0xff] %v619
        %628 = vst [vmem:[%s234 + $0x10] sm:$0xff] %v620
        %629 = vst [vmem:[%s234 + $0x18] sm:$0xff] %v621
        %630 = vst [vmem:[%s234 + $0x20] sm:$0xff] %v622
        %631 = vst [vmem:[%s234 + $0x28] sm:$0xff] %v623
        %632 = vst [vmem:[%s234 + $0x30] sm:$0xff] %v624
        %633 = vst [vmem:[%s234 + $0x38] sm:$0xff] %v625
        %s634 = sand.u32 %s142, 1
        %s635 = scalar_lea.sflag [#allocation3], %s634
        %s636 = sand.u32 %s142, 1
        %s637 = smul.addr %s636, 64
        %s638 = scalar_lea.vmem [#allocation2], %s637
        // Predicated region
        $region41: #{tpu_custom_call.1} parent=39 // pred_check
          %p639 = pneg %p152
        $region42: #{tpu_custom_call.1} parent=39 // pred_check_branch
          %641 = sbr.rel (%p639) target = $region44
        $region43: #{tpu_custom_call.1} parent=39 // pred_region
          %s642 = smul.u32 8, %s19
          %s644 = ssub.s32 1024, 1024
          %645 = vsyncadd %s635, %s644
          %s646 = smul.addr %s642, 128
          %s647 = scalar_lea.hbm %s5, %s646
          %s648 = sshll.u32 %s638, 4
          %s649 = int_to_ptr.vmem [resolvable:$true] %s648
          %654 = dma.vmem_to_hbm [thread:$0]  %s649, 1024, %s647, %s635, 128, 128, 8
        $region44: #{tpu_custom_call.1} parent=39 // pred_fallthru
          _
      $region40: #{tpu_custom_call.1} parent=5 // pred_fallthru
        _
      %p655 = scmp.le.s32.totalorder 2, %s14
      // Predicated region
      $region45: #{tpu_custom_call.1} parent=5 // pred_check
        %p656 = pneg %p655
      $region46: #{tpu_custom_call.1} parent=5 // pred_check_branch
        %658 = sbr.rel (%p656) target = $region48
      $region47: #{tpu_custom_call.1} parent=5 // pred_region
        %s659 = ssub.s32 %s14, 2
        // Predicated region
        $region49: #{tpu_custom_call.1} parent=47 // pred_check
          %p660 = pneg %p158
        $region50: #{tpu_custom_call.1} parent=47 // pred_check_branch
          %662 = sbr.rel (%p660) target = $region52
        $region51: #{tpu_custom_call.1} parent=47 // pred_region
          %s663 = sand.u32 %s143, 1
          %s664 = scalar_lea.sflag [#allocation3], %s663
          %s665 = sand.u32 %s143, 1
          %s666 = smul.addr %s665, 64
          %s667 = scalar_lea.vmem [#allocation2], %s666
          %668 = dma.done %s664, 1024
        $region52: #{tpu_custom_call.1} parent=47 // pred_fallthru
          _
      $region48: #{tpu_custom_call.1} parent=5 // pred_fallthru
        _
    $region6: #{tpu_custom_call.1} parent=1 // loop_footer
      %s18 = sadd.s32 1, %s14
    $region7: #{tpu_custom_call.1} parent=1 // loop_footer_branch
      %13 = sbr.rel target = $region3
    $region8: #{tpu_custom_call.1} parent=1 // loop_exit
      _
    %669 = vsyncpa [#allocation3], 1
    %s670 = scalar_lea.sflag [#allocation3], 1
    %671 = vsyncpa %s670, 1

// kernel: tpu_custom_call.1
$region0: #{tpu_custom_call.1}
  #allocation0 [shape = 'u32[]', space=smem, size = 0x4, offset = 0x4, fixed_abs, tag = 'smem constant byte address 0x4 - core index']
  #allocation1 [shape = 'u32[144,128]{1,0:T(1,128)}', space=vmem, size = 0x12000, scoped, tag = 'internal scratch']
  %s0 = inlined_call_operand.vmem [shape: f32[128,64], index: 0, kind: input, shape index: {}]
  %s1 = inlined_call_operand.vmem [shape: f32[128,64], index: 1, kind: input, shape index: {}]
  %s2 = inlined_call_operand.vmem [shape: f32[64,64], index: 2, kind: input, shape index: {}]
  %s3 = inlined_call_operand.vmem [shape: f32[128,64], index: 3, kind: input, shape index: {}]
  %s4 = inlined_call_operand.vmem [shape: f32[1,128], index: 4, kind: input, shape index: {}]
  %s5 = inlined_call_operand.hbm [shape: f32[128,128], index: 5, kind: output, shape index: {}]
  %s6 = sld [smem:[#allocation0]]
  $region53: #{tpu_custom_call.1} parent=0
    _
  %s8 = ssub.s32 1, %s6
  %s9 = scalar_select 0, %s8, %s6
  $region1: #{tpu_custom_call.1} parent=0
    #allocation2 [shape = 'u8[65536]{0}', space=vmem, size = 0x10000, scoped, tag = 'output window, operand 0']
    #allocation3 [shape = 's32[2]{0}', space=sflag, size = 0x8, scoped, tag = 'scoped memory for tpu_custom_call.1']
    %10 = vsyncpa [#allocation3], 0
    %s11 = scalar_lea.sflag [#allocation3], 1
    %12 = vsyncpa %s11, 0
    loop: start=0, step=1, limit=4
    $region2: #{tpu_custom_call.1} parent=1 // loop_pre_header
      _
    $region3: #{tpu_custom_call.1} parent=1 // loop_header
      %s14 = sphi 0, %s18
      %p15 = scmp.ge.s32.totalorder %s14, 4
      %s24 = sphi 0, %s26
      %s27 = sphi 0, %s24
      %s28 = sphi 0, %s27
      %s44 = sphi 0, %s28
      %s50 = sphi 0, %s52
      %s53 = sphi 0, %s50
      %s54 = sphi 0, %s53
      %s70 = sphi 0, %s54
      %s74 = sphi 0, %s74
      %s76 = sphi 0, %s74
      %s77 = sphi 0, %s76
      %s91 = sphi 0, %s77
      %s95 = sphi 0, %s95
      %s97 = sphi 0, %s95
      %s98 = sphi 0, %s97
      %s112 = sphi 0, %s98
      %s116 = sphi 0, %s116
      %s118 = sphi 0, %s116
      %s119 = sphi 0, %s118
      %s133 = sphi 0, %s119
      %s139 = sphi 0, %s141
      %s142 = sphi 0, %s139
      %s143 = sphi 0, %s142
      %s159 = sphi 0, %s143
    $region4: #{tpu_custom_call.1} parent=1 // loop_header_branch
      %17 = sbr.rel (%p15) target = $region8
    $region5: #{tpu_custom_call.1} parent=1 // loop_body
      %s19 = ssub.s32 %s14, 1
      %s20 = ssub.s32 %s14, 2
      %s21 = sadd.s32 %s14, 1
      %s22 = ssub.s32 %s14, %s21
      %p23 = scmp.eq.s32.totalorder %s22, 0
      %s25 = sadd.s32 %s24, 1
      %s26 = scalar_select %p23, %s24, %s25
      %p29 = pneg %p23
      %p30 = scmp.eq.s32.totalorder %s14, 1
      %p31 = por %p29, %p30
      %p32 = scmp.ne.s32.totalorder %s24, %s27
      %p33 = scmp.eq.s32.totalorder %s14, 0
      %p34 = por %p32, %p33
      %p35 = scmp.ne.s32.totalorder %s24, %s27
      %p36 = scmp.eq.s32.totalorder %s19, 1
      %p37 = por %p35, %p36
      %p38 = scmp.ne.s32.totalorder %s27, %s28
      %p39 = scmp.eq.s32.totalorder %s19, 0
      %p40 = por %p38, %p39
      %p41 = scmp.ne.s32.totalorder %s27, %s28
      %p42 = scmp.eq.s32.totalorder %s20, 1
      %p43 = por %p41, %p42
      %p45 = scmp.ne.s32.totalorder %s28, %s44
      %p46 = scmp.eq.s32.totalorder %s20, 0
      %p47 = por %p45, %p46
      %s48 = ssub.s32 %s14, %s21
      %p49 = scmp.eq.s32.totalorder %s48, 0
      %s51 = sadd.s32 %s50, 1
      %s52 = scalar_select %p49, %s50, %s51
      %p55 = pneg %p49
      %p56 = scmp.eq.s32.totalorder %s14, 1
      %p57 = por %p55, %p56
      %p58 = scmp.ne.s32.totalorder %s50, %s53
      %p59 = scmp.eq.s32.totalorder %s14, 0
      %p60 = por %p58, %p59
      %p61 = scmp.ne.s32.totalorder %s50, %s53
      %p62 = scmp.eq.s32.totalorder %s19, 1
      %p63 = por %p61, %p62
      %p64 = scmp.ne.s32.totalorder %s53, %s54
      %p65 = scmp.eq.s32.totalorder %s19, 0
      %p66 = por %p64, %p65
      %p67 = scmp.ne.s32.totalorder %s53, %s54
      %p68 = scmp.eq.s32.totalorder %s20, 1
      %p69 = por %p67, %p68
      %p71 = scmp.ne.s32.totalorder %s54, %s70
      %p72 = scmp.eq.s32.totalorder %s20, 0
      %p73 = por %p71, %p72
      %s75 = sadd.s32 %s74, 1
      %p78 = scmp.eq.s32.totalorder %s14, 1
      %p79 = scmp.ne.s32.totalorder %s74, %s76
      %p80 = scmp.eq.s32.totalorder %s14, 0
      %p81 = por %p79, %p80
      %p82 = scmp.ne.s32.totalorder %s74, %s76
      %p83 = scmp.eq.s32.totalorder %s19, 1
      %p84 = por %p82, %p83
      %p85 = scmp.ne.s32.totalorder %s76, %s77
      %p86 = scmp.eq.s32.totalorder %s19, 0
      %p87 = por %p85, %p86
      %p88 = scmp.ne.s32.totalorder %s76, %s77
      %p89 = scmp.eq.s32.totalorder %s20, 1
      %p90 = por %p88, %p89
      %p92 = scmp.ne.s32.totalorder %s77, %s91
      %p93 = scmp.eq.s32.totalorder %s20, 0
      %p94 = por %p92, %p93
      %s96 = sadd.s32 %s95, 1
      %p99 = scmp.eq.s32.totalorder %s14, 1
      %p100 = scmp.ne.s32.totalorder %s95, %s97
      %p101 = scmp.eq.s32.totalorder %s14, 0
      %p102 = por %p100, %p101
      %p103 = scmp.ne.s32.totalorder %s95, %s97
      %p104 = scmp.eq.s32.totalorder %s19, 1
      %p105 = por %p103, %p104
      %p106 = scmp.ne.s32.totalorder %s97, %s98
      %p107 = scmp.eq.s32.totalorder %s19, 0
      %p108 = por %p106, %p107
      %p109 = scmp.ne.s32.totalorder %s97, %s98
      %p110 = scmp.eq.s32.totalorder %s20, 1
      %p111 = por %p109, %p110
      %p113 = scmp.ne.s32.totalorder %s98, %s112
      %p114 = scmp.eq.s32.totalorder %s20, 0
      %p115 = por %p113, %p114
      %s117 = sadd.s32 %s116, 1
      %p120 = scmp.eq.s32.totalorder %s14, 1
      %p121 = scmp.ne.s32.totalorder %s116, %s118
      %p122 = scmp.eq.s32.totalorder %s14, 0
      %p123 = por %p121, %p122
      %p124 = scmp.ne.s32.totalorder %s116, %s118
      %p125 = scmp.eq.s32.totalorder %s19, 1
      %p126 = por %p124, %p125
      %p127 = scmp.ne.s32.totalorder %s118, %s119
      %p128 = scmp.eq.s32.totalorder %s19, 0
      %p129 = por %p127, %p128
      %p130 = scmp.ne.s32.totalorder %s118, %s119
      %p131 = scmp.eq.s32.totalorder %s20, 1
      %p132 = por %p130, %p131
      %p134 = scmp.ne.s32.totalorder %s119, %s133
      %p135 = scmp.eq.s32.totalorder %s20, 0
      %p136 = por %p134, %p135
      %s137 = ssub.s32 %s14, %s21
      %p138 = scmp.eq.s32.totalorder %s137, 0
      %s140 = sadd.s32 %s139, 1
      %s141 = scalar_select %p138, %s139, %s140
      %p144 = pneg %p138
      %p145 = scmp.eq.s32.totalorder %s14, 1
      %p146 = por %p144, %p145
      %p147 = scmp.ne.s32.totalorder %s139, %s142
      %p148 = scmp.eq.s32.totalorder %s14, 0
      %p149 = por %p147, %p148
      %p150 = scmp.ne.s32.totalorder %s139, %s142
      %p151 = scmp.eq.s32.totalorder %s19, 1
      %p152 = por %p150, %p151
      %p153 = scmp.ne.s32.totalorder %s142, %s143
      %p154 = scmp.eq.s32.totalorder %s19, 0
      %p155 = por %p153, %p154
      %p156 = scmp.ne.s32.totalorder %s142, %s143
      %p157 = scmp.eq.s32.totalorder %s20, 1
      %p158 = por %p156, %p157
      %p160 = scmp.ne.s32.totalorder %s143, %s159
      %p161 = scmp.eq.s32.totalorder %s20, 0
      %p162 = por %p160, %p161
      %p163 = scmp.le.s32.totalorder 1, %s14
      %p164 = scmp.lt.s32.totalorder %s14, 3
      %p165 = pnand %p163, %p164
      %p166 = pneg %p165
      // Predicated region
      $region9: #{tpu_custom_call.1} parent=5 // pred_check
        _
      $region10: #{tpu_custom_call.1} parent=5 // pred_check_branch
        %168 = sbr.rel (%p165) target = $region12
      $region11: #{tpu_custom_call.1} parent=5 // pred_region
        %s169 = ssub.s32 %s14, 1
        // Predicated region
        $region13: #{tpu_custom_call.1} parent=11 // pred_check
          %p170 = pneg %p87
        $region14: #{tpu_custom_call.1} parent=11 // pred_check_branch
          %172 = sbr.rel (%p170) target = $region16
        $region15: #{tpu_custom_call.1} parent=11 // pred_region
          _
        $region16: #{tpu_custom_call.1} parent=11 // pred_fallthru
          _
        // Predicated region
        $region17: #{tpu_custom_call.1} parent=11 // pred_check
          %p173 = pneg %p108
        $region18: #{tpu_custom_call.1} parent=11 // pred_check_branch
          %175 = sbr.rel (%p173) target = $region20
        $region19: #{tpu_custom_call.1} parent=11 // pred_region
          _
        $region20: #{tpu_custom_call.1} parent=11 // pred_fallthru
          _
        // Predicated region
        $region21: #{tpu_custom_call.1} parent=11 // pred_check
          %p176 = pneg %p129
        $region22: #{tpu_custom_call.1} parent=11 // pred_check_branch
          %178 = sbr.rel (%p176) target = $region24
        $region23: #{tpu_custom_call.1} parent=11 // pred_region
          _
        $region24: #{tpu_custom_call.1} parent=11 // pred_fallthru
          _
      $region12: #{tpu_custom_call.1} parent=5 // pred_fallthru
        _
      %p179 = scmp.lt.s32.totalorder %s14, 2
      // Predicated region
      $region25: #{tpu_custom_call.1} parent=5 // pred_check
        %p180 = pneg %p179
      $region26: #{tpu_custom_call.1} parent=5 // pred_check_branch
        %182 = sbr.rel (%p180) target = $region28
      $region27: #{tpu_custom_call.1} parent=5 // pred_region
        // Predicated region
        $region29: #{tpu_custom_call.1} parent=27 // pred_check
          %p183 = pneg %p34
        $region30: #{tpu_custom_call.1} parent=27 // pred_check_branch
          %185 = sbr.rel (%p183) target = $region32
        $region31: #{tpu_custom_call.1} parent=27 // pred_region
          %s186 = smul.u32 8, %s14
          %p187 = scmp.lt.s32.totalorder %s186, 15
          %s188 = scalar_select %p187, %s186, 15
          %s189 = smul.addr %s188, 8
          %s190 = scalar_lea.vmem %s0, %s189
          %s191 = smul.u32 8, %s14
        $region32: #{tpu_custom_call.1} parent=27 // pred_fallthru
          _
        // Predicated region
        $region33: #{tpu_custom_call.1} parent=27 // pred_check
          %p192 = pneg %p60
        $region34: #{tpu_custom_call.1} parent=27 // pred_check_branch
          %194 = sbr.rel (%p192) target = $region36
        $region35: #{tpu_custom_call.1} parent=27 // pred_region
          %s195 = smul.u32 8, %s14
          %p196 = scmp.lt.s32.totalorder %s195, 15
          %s197 = scalar_select %p196, %s195, 15
          %s198 = smul.addr %s197, 8
          %s199 = scalar_lea.vmem %s1, %s198
          %s200 = smul.u32 8, %s14
        $region36: #{tpu_custom_call.1} parent=27 // pred_fallthru
          _
      $region28: #{tpu_custom_call.1} parent=5 // pred_fallthru
        _
      %p201 = scmp.le.s32.totalorder 1, %s14
      %p202 = scmp.lt.s32.totalorder %s14, 3
      %p203 = pnand %p201, %p202
      %p204 = pneg %p203
      // Predicated region
      $region37: #{tpu_custom_call.1} parent=5 // pred_check
        _
      $region38: #{tpu_custom_call.1} parent=5 // pred_check_branch
        %206 = sbr.rel (%p203) target = $region40
      $region39: #{tpu_custom_call.1} parent=5 // pred_region
        %s207 = ssub.s32 %s14, 1
        %s208 = smul.u32 8, %s19
        %p209 = scmp.lt.s32.totalorder %s208, 15
        %s210 = scalar_select %p209, %s208, 15
        %s211 = smul.addr %s210, 8
        %s212 = scalar_lea.vmem %s0, %s211
        %p213 = pneg %p40
        %p214 = pneg %p37
        %s215 = smul.u32 8, %s19
        %p216 = scmp.lt.s32.totalorder %s215, 15
        %s217 = scalar_select %p216, %s215, 15
        %s218 = smul.addr %s217, 8
        %s219 = scalar_lea.vmem %s1, %s218
        %p220 = pneg %p66
        %p221 = pneg %p63
        %p222 = pneg %p87
        %p223 = pneg %p84
        %p224 = pneg %p108
        %p225 = pneg %p105
        %p226 = pneg %p129
        %p227 = pneg %p126
        %p228 = pneg %p155
        %p229 = pneg %p152
        %s230 = sand.u32 %s142, 1
        %s231 = scalar_lea.sflag [#allocation3], %s230
        %s232 = sand.u32 %s142, 1
        %s233 = smul.addr %s232, 64
        %s234 = scalar_lea.vmem [#allocation2], %s233
        %s235 = smul.u32 8, %s19
        %p236 = scmp.lt.s32.totalorder %s235, 15
        %s237 = scalar_select %p236, %s235, 15
        %s238 = smul.addr %s237, 8
        %s239 = scalar_lea.vmem %s0, %s238
        %s240 = smul.u32 8, %s19
        %s241 = smul.u32 8, %s19
        %p242 = scmp.lt.s32.totalorder %s241, 15
        %s243 = scalar_select %p242, %s241, 15
        %s244 = smul.addr %s243, 8
        %s245 = scalar_lea.vmem %s1, %s244
        %s246 = smul.u32 8, %s19
        %s247 = smul.u32 8, %s19
        %v248 = vld [vmem:[%s239] sm:$0xff]
        %v249 = vld [vmem:[%s239 + $0x8] sm:$0xff]
        %v250 = vld [vmem:[%s239 + $0x10] sm:$0xff]
        %v251 = vld [vmem:[%s239 + $0x18] sm:$0xff]
        %v252 = vld [vmem:[%s239 + $0x20] sm:$0xff]
        %v253 = vld [vmem:[%s239 + $0x28] sm:$0xff]
        %v254 = vld [vmem:[%s239 + $0x30] sm:$0xff]
        %v255 = vld [vmem:[%s239 + $0x38] sm:$0xff]
        %v256 = vld [vmem:[%s245] sm:$0xff]
        %v257 = vld [vmem:[%s245 + $0x8] sm:$0xff]
        %v258 = vld [vmem:[%s245 + $0x10] sm:$0xff]
        %v259 = vld [vmem:[%s245 + $0x18] sm:$0xff]
        %v260 = vld [vmem:[%s245 + $0x20] sm:$0xff]
        %v261 = vld [vmem:[%s245 + $0x28] sm:$0xff]
        %v262 = vld [vmem:[%s245 + $0x30] sm:$0xff]
        %v263 = vld [vmem:[%s245 + $0x38] sm:$0xff]
        %v264 = vld [vmem:[%s2] sm:$0xff]
        %v265 = vld [vmem:[%s2 + $0x8] sm:$0xff]
        %v266 = vld [vmem:[%s2 + $0x10] sm:$0xff]
        %v267 = vld [vmem:[%s2 + $0x18] sm:$0xff]
        %v268 = vld [vmem:[%s2 + $0x20] sm:$0xff]
        %v269 = vld [vmem:[%s2 + $0x28] sm:$0xff]
        %v270 = vld [vmem:[%s2 + $0x30] sm:$0xff]
        %v271 = vld [vmem:[%s2 + $0x38] sm:$0xff]
        %vm272 = vcmask 523264
        %v274 = vsel %vm272, %v248, 0
        %v277 = vsel %vm272, %v249, 0
        %v280 = vsel %vm272, %v250, 0
        %v283 = vsel %vm272, %v251, 0
        %v286 = vsel %vm272, %v252, 0
        %v289 = vsel %vm272, %v253, 0
        %v292 = vsel %vm272, %v254, 0
        %v295 = vsel %vm272, %v255, 0
        %297 = vmatprep.subr.mxu0 0.0
        %298 = vmatpush1.msra.mxu0 0.0
        %299 = vmatprep.subr.mxu0 0.0
        %300 = vmatpush1.msra.mxu0 0.0
        %301 = vmatprep.subr.mxu0 0.0
        %302 = vmatpush1.msra.mxu0 0.0
        %303 = vmatprep.subr.mxu0 0.0
        %304 = vmatpush1.msra.mxu0 0.0
        %305 = vmatprep.subr.mxu0 0.0
        %306 = vmatpush1.msra.mxu0 0.0
        %307 = vmatprep.subr.mxu0 0.0
        %308 = vmatpush1.msra.mxu0 0.0
        %309 = vmatprep.subr.mxu0 0.0
        %310 = vmatpush1.msra.mxu0 0.0
        %311 = vmatprep.subr.mxu0 0.0
        %312 = vmatpush1.msra.mxu0 0.0
        %313 = vmatprep.subr.mxu0 0.0
        %314 = vmatpush1.msra.mxu0 %v271
        %315 = vmatprep.subr.mxu0 0.0
        %316 = vmatpush1.msra.mxu0 %v270
        %317 = vmatprep.subr.mxu0 0.0
        %318 = vmatpush1.msra.mxu0 %v269
        %319 = vmatprep.subr.mxu0 0.0
        %320 = vmatpush1.msra.mxu0 %v268
        %321 = vmatprep.subr.mxu0 0.0
        %322 = vmatpush1.msra.mxu0 %v267
        %323 = vmatprep.subr.mxu0 0.0
        %324 = vmatpush1.msra.mxu0 %v266
        %325 = vmatprep.subr.mxu0 0.0
        %326 = vmatpush1.msra.mxu0 %v265
        %327 = vmatprep.subr.mxu0 0.0
        %328 = vmatpush1.msra.mxu0 %v264
        %329 = vmatprep.subr.mxu0 0.0
        %330 = vmatpush2.msra.mxu0 0.0
        %331 = vmatprep.subr.mxu0 0.0
        %332 = vmatpush2.msra.mxu0 0.0
        %333 = vmatprep.subr.mxu0 0.0
        %334 = vmatpush2.msra.mxu0 0.0
        %335 = vmatprep.subr.mxu0 0.0
        %336 = vmatpush2.msra.mxu0 0.0
        %337 = vmatprep.subr.mxu0 0.0
        %338 = vmatpush2.msra.mxu0 0.0
        %339 = vmatprep.subr.mxu0 0.0
        %340 = vmatpush2.msra.mxu0 0.0
        %341 = vmatprep.subr.mxu0 0.0
        %342 = vmatpush2.msra.mxu0 0.0
        %343 = vmatprep.subr.mxu0 0.0
        %344 = vmatpush2.msra.mxu0 0.0
        %345 = vmatprep.subr.mxu0 0.0
        %346 = vmatpush2.msra.mxu0 0.0
        %347 = vmatprep.subr.mxu0 0.0
        %348 = vmatpush2.msra.mxu0 0.0
        %349 = vmatprep.subr.mxu0 0.0
        %350 = vmatpush2.msra.mxu0 0.0
        %351 = vmatprep.subr.mxu0 0.0
        %352 = vmatpush2.msra.mxu0 0.0
        %353 = vmatprep.subr.mxu0 0.0
        %354 = vmatpush2.msra.mxu0 0.0
        %355 = vmatprep.subr.mxu0 0.0
        %356 = vmatpush2.msra.mxu0 0.0
        %357 = vmatprep.subr.mxu0 0.0
        %358 = vmatpush2.msra.mxu0 0.0
        %359 = vmatprep.subr.mxu0 0.0
        %360 = vmatpush2.msra.mxu0 0.0
        %361 = vmatprep.mubr.f32.mxu0 0.0
        %362 = vmatmul.mubr.f32.gmra.mxu0 %v274
        %v363 = vpop.f32.mrf.mxu0
        %v364 = vadd.f32 0.0, %v363
        %v365 = vpop.f32.mrf.mxu0
        %366 = vmatprep.mubr.f32.mxu0 0.0
        %367 = vmatmul.mubr.f32.gmra.mxu0 %v277
        %v368 = vpop.f32.mrf.mxu0
        %v369 = vadd.f32 0.0, %v368
        %v370 = vpop.f32.mrf.mxu0
        %371 = vmatprep.mubr.f32.mxu0 0.0
        %372 = vmatmul.mubr.f32.gmra.mxu0 %v280
        %v373 = vpop.f32.mrf.mxu0
        %v374 = vadd.f32 0.0, %v373
        %v375 = vpop.f32.mrf.mxu0
        %376 = vmatprep.mubr.f32.mxu0 0.0
        %377 = vmatmul.mubr.f32.gmra.mxu0 %v283
        %v378 = vpop.f32.mrf.mxu0
        %v379 = vadd.f32 0.0, %v378
        %v380 = vpop.f32.mrf.mxu0
        %381 = vmatprep.mubr.f32.mxu0 0.0
        %382 = vmatmul.mubr.f32.gmra.mxu0 %v286
        %v383 = vpop.f32.mrf.mxu0
        %v384 = vadd.f32 0.0, %v383
        %v385 = vpop.f32.mrf.mxu0
        %386 = vmatprep.mubr.f32.mxu0 0.0
        %387 = vmatmul.mubr.f32.gmra.mxu0 %v289
        %v388 = vpop.f32.mrf.mxu0
        %v389 = vadd.f32 0.0, %v388
        %v390 = vpop.f32.mrf.mxu0
        %391 = vmatprep.mubr.f32.mxu0 0.0
        %392 = vmatmul.mubr.f32.gmra.mxu0 %v292
        %v393 = vpop.f32.mrf.mxu0
        %v394 = vadd.f32 0.0, %v393
        %v395 = vpop.f32.mrf.mxu0
        %396 = vmatprep.mubr.f32.mxu0 0.0
        %397 = vmatmul.mubr.f32.gmra.mxu0 %v295
        %v398 = vpop.f32.mrf.mxu0
        %v399 = vadd.f32 0.0, %v398
        %v400 = vpop.f32.mrf.mxu0
        %401 = vdwg.mxu0
        %v402 = vmul.f32 %v248, %v248
        %v403 = vmul.f32 %v249, %v249
        %v404 = vmul.f32 %v250, %v250
        %v405 = vmul.f32 %v251, %v251
        %v406 = vmul.f32 %v252, %v252
        %v407 = vmul.f32 %v253, %v253
        %v408 = vmul.f32 %v254, %v254
        %v409 = vmul.f32 %v255, %v255
        %418 = vrot.lane.b32.xlu0 %v256, 64
        %v419 = vpop.permute.xlu0 %418
        %420 = vrot.lane.b32.xlu0 %v257, 64
        %v421 = vpop.permute.xlu0 %420
        %422 = vrot.lane.b32.xlu0 %v258, 64
        %v423 = vpop.permute.xlu0 %422
        %424 = vrot.lane.b32.xlu0 %v259, 64
        %v425 = vpop.permute.xlu0 %424
        %426 = vrot.lane.b32.xlu0 %v260, 64
        %v427 = vpop.permute.xlu0 %426
        %428 = vrot.lane.b32.xlu0 %v261, 64
        %v429 = vpop.permute.xlu0 %428
        %430 = vrot.lane.b32.xlu0 %v262, 64
        %v431 = vpop.permute.xlu0 %430
        %432 = vrot.lane.b32.xlu0 %v263, 64
        %v433 = vpop.permute.xlu0 %432
        %v442 = vsel %vm272, %v402, %v419
        %v443 = vsel %vm272, %v403, %v421
        %v444 = vsel %vm272, %v404, %v423
        %v445 = vsel %vm272, %v405, %v425
        %v446 = vsel %vm272, %v406, %v427
        %v447 = vsel %vm272, %v407, %v429
        %v448 = vsel %vm272, %v408, %v431
        %v449 = vsel %vm272, %v409, %v433
        %v450 = vld [vmem:[%s3] sm:$0xff]
        %v451 = vld [vmem:[%s3 + $0x8] sm:$0xff]
        %v452 = vld [vmem:[%s3 + $0x10] sm:$0xff]
        %v453 = vld [vmem:[%s3 + $0x18] sm:$0xff]
        %v454 = vld [vmem:[%s3 + $0x20] sm:$0xff]
        %v455 = vld [vmem:[%s3 + $0x28] sm:$0xff]
        %v456 = vld [vmem:[%s3 + $0x30] sm:$0xff]
        %v457 = vld [vmem:[%s3 + $0x38] sm:$0xff]
        %v458 = vld [vmem:[%s3 + $0x40] sm:$0xff]
        %v459 = vld [vmem:[%s3 + $0x48] sm:$0xff]
        %v460 = vld [vmem:[%s3 + $0x50] sm:$0xff]
        %v461 = vld [vmem:[%s3 + $0x58] sm:$0xff]
        %v462 = vld [vmem:[%s3 + $0x60] sm:$0xff]
        %v463 = vld [vmem:[%s3 + $0x68] sm:$0xff]
        %v464 = vld [vmem:[%s3 + $0x70] sm:$0xff]
        %v465 = vld [vmem:[%s3 + $0x78] sm:$0xff]
        %466 = vmatprep.subr.mxu0 0.0
        %467 = vmatpush1.msra.mxu0 %v465
        %468 = vmatprep.subr.mxu0 0.0
        %469 = vmatpush1.msra.mxu0 %v464
        %470 = vmatprep.subr.mxu0 0.0
        %471 = vmatpush1.msra.mxu0 %v463
        %472 = vmatprep.subr.mxu0 0.0
        %473 = vmatpush1.msra.mxu0 %v462
        %474 = vmatprep.subr.mxu0 0.0
        %475 = vmatpush1.msra.mxu0 %v461
        %476 = vmatprep.subr.mxu0 0.0
        %477 = vmatpush1.msra.mxu0 %v460
        %478 = vmatprep.subr.mxu0 0.0
        %479 = vmatpush1.msra.mxu0 %v459
        %480 = vmatprep.subr.mxu0 0.0
        %481 = vmatpush1.msra.mxu0 %v458
        %482 = vmatprep.subr.mxu0 0.0
        %483 = vmatpush1.msra.mxu0 %v457
        %484 = vmatprep.subr.mxu0 0.0
        %485 = vmatpush1.msra.mxu0 %v456
        %486 = vmatprep.subr.mxu0 0.0
        %487 = vmatpush1.msra.mxu0 %v455
        %488 = vmatprep.subr.mxu0 0.0
        %489 = vmatpush1.msra.mxu0 %v454
        %490 = vmatprep.subr.mxu0 0.0
        %491 = vmatpush1.msra.mxu0 %v453
        %492 = vmatprep.subr.mxu0 0.0
        %493 = vmatpush1.msra.mxu0 %v452
        %494 = vmatprep.subr.mxu0 0.0
        %495 = vmatpush1.msra.mxu0 %v451
        %496 = vmatprep.subr.mxu0 0.0
        %497 = vmatpush1.msra.mxu0 %v450
        %498 = vmatprep.subr.mxu0 0.0
        %499 = vmatpush2.msra.mxu0 0.0
        %500 = vmatprep.subr.mxu0 0.0
        %501 = vmatpush2.msra.mxu0 0.0
        %502 = vmatprep.subr.mxu0 0.0
        %503 = vmatpush2.msra.mxu0 0.0
        %504 = vmatprep.subr.mxu0 0.0
        %505 = vmatpush2.msra.mxu0 0.0
        %506 = vmatprep.subr.mxu0 0.0
        %507 = vmatpush2.msra.mxu0 0.0
        %508 = vmatprep.subr.mxu0 0.0
        %509 = vmatpush2.msra.mxu0 0.0
        %510 = vmatprep.subr.mxu0 0.0
        %511 = vmatpush2.msra.mxu0 0.0
        %512 = vmatprep.subr.mxu0 0.0
        %513 = vmatpush2.msra.mxu0 0.0
        %514 = vmatprep.subr.mxu0 0.0
        %515 = vmatpush2.msra.mxu0 0.0
        %516 = vmatprep.subr.mxu0 0.0
        %517 = vmatpush2.msra.mxu0 0.0
        %518 = vmatprep.subr.mxu0 0.0
        %519 = vmatpush2.msra.mxu0 0.0
        %520 = vmatprep.subr.mxu0 0.0
        %521 = vmatpush2.msra.mxu0 0.0
        %522 = vmatprep.subr.mxu0 0.0
        %523 = vmatpush2.msra.mxu0 0.0
        %524 = vmatprep.subr.mxu0 0.0
        %525 = vmatpush2.msra.mxu0 0.0
        %526 = vmatprep.subr.mxu0 0.0
        %527 = vmatpush2.msra.mxu0 0.0
        %528 = vmatprep.subr.mxu0 0.0
        %529 = vmatpush2.msra.mxu0 0.0
        %530 = vmatprep.mubr.f32.mxu0 0.0
        %531 = vmatmul.mubr.f32.gmra.mxu0 %v442
        %v532 = vpop.f32.mrf.mxu0
        %v533 = vadd.f32 0.0, %v532
        %v534 = vpop.f32.mrf.mxu0
        %535 = vmatprep.mubr.f32.mxu0 0.0
        %536 = vmatmul.mubr.f32.gmra.mxu0 %v443
        %v537 = vpop.f32.mrf.mxu0
        %v538 = vadd.f32 0.0, %v537
        %v539 = vpop.f32.mrf.mxu0
        %540 = vmatprep.mubr.f32.mxu0 0.0
        %541 = vmatmul.mubr.f32.gmra.mxu0 %v444
        %v542 = vpop.f32.mrf.mxu0
        %v543 = vadd.f32 0.0, %v542
        %v544 = vpop.f32.mrf.mxu0
        %545 = vmatprep.mubr.f32.mxu0 0.0
        %546 = vmatmul.mubr.f32.gmra.mxu0 %v445
        %v547 = vpop.f32.mrf.mxu0
        %v548 = vadd.f32 0.0, %v547
        %v549 = vpop.f32.mrf.mxu0
        %550 = vmatprep.mubr.f32.mxu0 0.0
        %551 = vmatmul.mubr.f32.gmra.mxu0 %v446
        %v552 = vpop.f32.mrf.mxu0
        %v553 = vadd.f32 0.0, %v552
        %v554 = vpop.f32.mrf.mxu0
        %555 = vmatprep.mubr.f32.mxu0 0.0
        %556 = vmatmul.mubr.f32.gmra.mxu0 %v447
        %v557 = vpop.f32.mrf.mxu0
        %v558 = vadd.f32 0.0, %v557
        %v559 = vpop.f32.mrf.mxu0
        %560 = vmatprep.mubr.f32.mxu0 0.0
        %561 = vmatmul.mubr.f32.gmra.mxu0 %v448
        %v562 = vpop.f32.mrf.mxu0
        %v563 = vadd.f32 0.0, %v562
        %v564 = vpop.f32.mrf.mxu0
        %565 = vmatprep.mubr.f32.mxu0 0.0
        %566 = vmatmul.mubr.f32.gmra.mxu0 %v449
        %v567 = vpop.f32.mrf.mxu0
        %v568 = vadd.f32 0.0, %v567
        %v569 = vpop.f32.mrf.mxu0
        %570 = vdwg.mxu0
        %579 = vrot.lane.b32.xlu0 %v533, 64
        %v580 = vpop.permute.xlu0 %579
        %581 = vrot.lane.b32.xlu0 %v538, 64
        %v582 = vpop.permute.xlu0 %581
        %583 = vrot.lane.b32.xlu0 %v543, 64
        %v584 = vpop.permute.xlu0 %583
        %585 = vrot.lane.b32.xlu0 %v548, 64
        %v586 = vpop.permute.xlu0 %585
        %587 = vrot.lane.b32.xlu0 %v553, 64
        %v588 = vpop.permute.xlu0 %587
        %589 = vrot.lane.b32.xlu0 %v558, 64
        %v590 = vpop.permute.xlu0 %589
        %591 = vrot.lane.b32.xlu0 %v563, 64
        %v592 = vpop.permute.xlu0 %591
        %593 = vrot.lane.b32.xlu0 %v568, 64
        %v594 = vpop.permute.xlu0 %593
        %v603 = vsel %vm272, %v364, %v580
        %v604 = vsel %vm272, %v369, %v582
        %v605 = vsel %vm272, %v374, %v584
        %v606 = vsel %vm272, %v379, %v586
        %v607 = vsel %vm272, %v384, %v588
        %v608 = vsel %vm272, %v389, %v590
        %v609 = vsel %vm272, %v394, %v592
        %v610 = vsel %vm272, %v399, %v594
        %v611 = vld [vmem:[%s4] sm:$0x1]
        %v613 = vlaneseq
        %v614 = vshrl.u32 %v613, 7
        %v615 = vsub.s32 0, %v614
        %v616 = vrot.slane %v611, %v615
        %v618 = vadd.f32 %v603, %v616
        %v619 = vadd.f32 %v604, %v616
        %v620 = vadd.f32 %v605, %v616
        %v621 = vadd.f32 %v606, %v616
        %v622 = vadd.f32 %v607, %v616
        %v623 = vadd.f32 %v608, %v616
        %v624 = vadd.f32 %v609, %v616
        %v625 = vadd.f32 %v610, %v616
        %626 = vst [vmem:[%s234] sm:$0xff] %v618
        %627 = vst [vmem:[%s234 + $0x8] sm:$0xff] %v619
        %628 = vst [vmem:[%s234 + $0x10] sm:$0xff] %v620
        %629 = vst [vmem:[%s234 + $0x18] sm:$0xff] %v621
        %630 = vst [vmem:[%s234 + $0x20] sm:$0xff] %v622
        %631 = vst [vmem:[%s234 + $0x28] sm:$0xff] %v623
        %632 = vst [vmem:[%s234 + $0x30] sm:$0xff] %v624
        %633 = vst [vmem:[%s234 + $0x38] sm:$0xff] %v625
        %s634 = sand.u32 %s142, 1
        %s635 = scalar_lea.sflag [#allocation3], %s634
        %s636 = sand.u32 %s142, 1
        %s637 = smul.addr %s636, 64
        %s638 = scalar_lea.vmem [#allocation2], %s637
        // Predicated region
        $region41: #{tpu_custom_call.1} parent=39 // pred_check
          %p639 = pneg %p152
        $region42: #{tpu_custom_call.1} parent=39 // pred_check_branch
          %641 = sbr.rel (%p639) target = $region44
        $region43: #{tpu_custom_call.1} parent=39 // pred_region
          %s642 = smul.u32 8, %s19
          %s644 = ssub.s32 1024, 1024
          %645 = vsyncadd %s635, %s644
          %s646 = smul.addr %s642, 128
          %s647 = scalar_lea.hbm %s5, %s646
          %s648 = sshll.u32 %s638, 4
          %s649 = int_to_ptr.vmem [resolvable:$true] %s648
          %654 = dma.vmem_to_hbm [thread:$0]  %s649, 1024, %s647, %s635, 128, 128, 8
        $region44: #{tpu_custom_call.1} parent=39 // pred_fallthru
          _
      $region40: #{tpu_custom_call.1} parent=5 // pred_fallthru
        _
      %p655 = scmp.le.s32.totalorder 2, %s14
      // Predicated region
      $region45: #{tpu_custom_call.1} parent=5 // pred_check
        %p656 = pneg %p655
      $region46: #{tpu_custom_call.1} parent=5 // pred_check_branch
        %658 = sbr.rel (%p656) target = $region48
      $region47: #{tpu_custom_call.1} parent=5 // pred_region
        %s659 = ssub.s32 %s14, 2
        // Predicated region
        $region49: #{tpu_custom_call.1} parent=47 // pred_check
          %p660 = pneg %p158
        $region50: #{tpu_custom_call.1} parent=47 // pred_check_branch
          %662 = sbr.rel (%p660) target = $region52
        $region51: #{tpu_custom_call.1} parent=47 // pred_region
          %s663 = sand.u32 %s143, 1
          %s664 = scalar_lea.sflag [#allocation3], %s663
          %s665 = sand.u32 %s143, 1
          %s666 = smul.addr %s665, 64
          %s667 = scalar_lea.vmem [#allocation2], %s666
          %668 = dma.done %s664, 1024
        $region52: #{tpu_custom_call.1} parent=47 // pred_fallthru
          _
      $region48: #{tpu_custom_call.1} parent=5 // pred_fallthru
        _
    $region6: #{tpu_custom_call.1} parent=1 // loop_footer
      %s18 = sadd.s32 1, %s14
    $region7: #{tpu_custom_call.1} parent=1 // loop_footer_branch
      %13 = sbr.rel target = $region3
    $region8: #{tpu_custom_call.1} parent=1 // loop_exit
      _
    %669 = vsyncpa [#allocation3], 1
    %s670 = scalar_lea.sflag [#allocation3], 1
    %671 = vsyncpa %s670, 1

</llo_original>
